<compile_context>
chip_gen: v6e
topology: v6e:2x2x1
jax: 0.10.0
libtpu: 0.0.40
codegen_flags: <defaults>
</compile_context>

<pallas_src>
import jax
import jax.numpy as jnp
import numpy as np
from jax import lax
from jax.experimental import pallas as pl
from jax.experimental.pallas import tpu as pltpu


def gru_encoder_kernel(x_ref, wih_ref, whh_ref, b_ref, bhn_ref, h_out_ref):
    """Single-invocation GRU recurrence over the full (small) sequence.

    x_ref    : (S*B, F)   time-major input, time folded into rows
    wih_ref  : (F, 3G)    fused input weights, gate g in lanes [g*G, g*G+H)
    whh_ref  : (G, 3G)    fused hidden weights (rows >= H and pad lanes are 0)
    b_ref    : (1, 3G)    r/z slots hold b_ih + b_hh; n slot holds b_ih_n only
    bhn_ref  : (1, G)     b_hh_n (applied inside r * (.), PyTorch GRU semantics)
    h_out_ref: (1, B, H)  final hidden state
    """
    G = whh_ref.shape[0]                     # per-gate lane width (128-aligned)
    _, batch, hidden = h_out_ref.shape
    seq_len = x_ref.shape[0] // batch

    wih = wih_ref[...]
    whh = whh_ref[...]

    # --- Hoisted off the serial h-dependency chain --------------------------
    # One batched MXU matmul projects every time step at once; r/z/n input
    # biases are folded here.  (16,4) @ (4,3G) is far friendlier to the MXU
    # than eight (2,4) @ (4,3G) pushes inside the loop.
    gi_all = (jnp.dot(x_ref[...], wih, preferred_element_type=jnp.float32)
              + b_ref[...])                                          # (S*B, 3G)
    # Broadcast b_hh_n once, not once per unrolled step.
    bhn = jnp.broadcast_to(bhn_ref[...], (batch, G))

    # --- Serial recurrence: only h @ W_hh + gate math remains per step ------
    h = jnp.zeros((batch, G), jnp.float32)
    for t in range(seq_len):                 # fully unrolled, static indices
        gi = gi_all[t * batch:(t + 1) * batch, :]                    # (B, 3G)
        gh = jnp.dot(h, whh, preferred_element_type=jnp.float32)     # (B, 3G)
        r = jax.nn.sigmoid(gi[:, 0:G] + gh[:, 0:G])          # 128-lane aligned
        z = jax.nn.sigmoid(gi[:, G:2 * G] + gh[:, G:2 * G])
        n = jnp.tanh(gi[:, 2 * G:] + r * (gh[:, 2 * G:] + bhn))
        h = n + z * (h - n)          # == (1 - z) * n + z * h, one fewer mul

    h_out_ref[0] = h[:, 0:hidden].astype(h_out_ref.dtype)


def encoder_forward(x, w_ih, w_hh, b_ih, b_hh):
    """x: (seq_len, batch, n_features) -> hidden: (1, batch, hidden_size).

    Per-gate parameters in PyTorch GRU gate order (r, z, n):
      w_ih: (3, F, H), w_hh: (3, H, H), b_ih/b_hh: (3, 1, H).
    (Converting from PyTorch's packed weight_ih_l0 of shape (3H, F) requires a
     reshape to (3, H, F) and a transpose of the last two dims, preserving the
     r, z, n gate order.)
    """
    seq_len, batch, n_features = x.shape
    hidden = w_hh.shape[-1]
    # Pad each gate to a full 128-lane block so in-kernel gate slices are
    # vreg-aligned (no per-step lane relayouts).  Zero padding is inert.
    G = ((hidden + 127) // 128) * 128

    def pad_lanes(m):                         # (rows, H) -> (rows, G)
        return jnp.pad(m, ((0, 0), (0, G - hidden)))

    w_ih_p = jnp.concatenate([pad_lanes(w_ih[g]) for g in range(3)], axis=1)  # (F, 3G)
    w_hh_p = jnp.pad(
        jnp.concatenate([pad_lanes(w_hh[g]) for g in range(3)], axis=1),
        ((0, G - hidden), (0, 0)))                                            # (G, 3G)
    # Fold b_ih + b_hh for r/z; the n gate keeps only b_ih_n because b_hh_n
    # must stay inside r * (h @ W_hh_n + b_hh_n) per PyTorch GRU semantics.
    b_p = jnp.concatenate([pad_lanes(b_ih[0] + b_hh[0]),
                           pad_lanes(b_ih[1] + b_hh[1]),
                           pad_lanes(b_ih[2])], axis=1)                       # (1, 3G)
    bhn_p = pad_lanes(b_hh[2])                                                # (1, G)

    x_flat = x.reshape(seq_len * batch, n_features)      # time folded into rows

    vmem = pltpu.MemorySpace.VMEM
    # TODO(synk): scaling guard only — if seq_len/batch grow, tile the time
    # axis (grid with a resident h accumulator, axis "arbitrary") instead of
    # keeping all of x in VMEM (v7x: 64 MiB VMEM, v5e: 16 MiB default scoped
    # limit), and add a "parallel" batch-group axis so both v7x TensorCores
    # get work.  At S=8, B=2, F=4 everything fits trivially and a grid would
    # only add per-step pipeline overhead.
    return pl.pallas_call(
        gru_encoder_kernel,
        out_shape=jax.ShapeDtypeStruct((1, batch, hidden), jnp.float32),
        in_specs=[
            pl.BlockSpec(memory_space=vmem),   # x_flat  (S*B, F)
            pl.BlockSpec(memory_space=vmem),   # W_ih_p  (F, 3G)
            pl.BlockSpec(memory_space=vmem),   # W_hh_p  (G, 3G)
            pl.BlockSpec(memory_space=vmem),   # b_p     (1, 3G)
            pl.BlockSpec(memory_space=vmem),   # bhn_p   (1, G)
        ],
        out_specs=pl.BlockSpec(memory_space=vmem),
    )(x_flat, w_ih_p, w_hh_p, b_p, bhn_p)


def encoder_forward_ref(x, w_ih, w_hh, b_ih, b_hh):
    """Pure-JAX reference (lax.scan over per-gate math) for correctness."""
    _, batch, _ = x.shape
    hidden = w_hh.shape[-1]
    h0 = jnp.zeros((batch, hidden), jnp.float32)
    hi = jax.lax.Precision.HIGHEST

    def step(h, x_t):
        gi = [jnp.dot(x_t, w_ih[g], precision=hi) + b_ih[g] for g in range(3)]
        gh = [jnp.dot(h, w_hh[g], precision=hi) + b_hh[g] for g in range(3)]
        r = jax.nn.sigmoid(gi[0] + gh[0])
        z = jax.nn.sigmoid(gi[1] + gh[1])
        n = jnp.tanh(gi[2] + r * gh[2])
        h_new = (1.0 - z) * n + z * h
        return h_new, None

    h_last, _ = lax.scan(step, h0, x)
    return h_last[None, :, :]


if __name__ == "__main__":
    # Small shapes implied by the module: seq_len=8, batch=2, n_features=4,
    # hidden_size=32, num_layers=1 (dropout is inactive for a 1-layer GRU).
    seq_len, batch, n_features, hidden = 8, 2, 4, 32

    key = jax.random.PRNGKey(0)
    k_x, k_wih, k_whh, k_bih, k_bhh = jax.random.split(key, 5)

    # Deterministic PyTorch-style init: uniform(-1/sqrt(H), 1/sqrt(H)).
    bound = 1.0 / np.sqrt(hidden)
    x = jax.random.normal(k_x, (seq_len, batch, n_features), jnp.float32)
    w_ih = jax.random.uniform(k_wih, (3, n_features, hidden), jnp.float32, -bound, bound)
    w_hh = jax.random.uniform(k_whh, (3, hidden, hidden), jnp.float32, -bound, bound)
    b_ih = jax.random.uniform(k_bih, (3, 1, hidden), jnp.float32, -bound, bound)
    b_hh = jax.random.uniform(k_bhh, (3, 1, hidden), jnp.float32, -bound, bound)

    hidden_out = jax.block_until_ready(encoder_forward(x, w_ih, w_hh, b_ih, b_hh))
    hidden_ref = jax.block_until_ready(encoder_forward_ref(x, w_ih, w_hh, b_ih, b_hh))

    assert hidden_out.shape == (1, batch, hidden)
    np.testing.assert_allclose(np.asarray(hidden_out), np.asarray(hidden_ref),
                               rtol=1e-4, atol=1e-4)

    print("KERNEL_OK")
</pallas_src>

<mosaic_0001>
module attributes {stable_mosaic.version = 11 : i64} {
  func.func @gru_encoder_kernel(%arg0: memref<16x4xf32, #tpu.memory_space<vmem>>, %arg1: memref<4x384xf32, #tpu.memory_space<vmem>>, %arg2: memref<128x384xf32, #tpu.memory_space<vmem>>, %arg3: memref<1x384xf32, #tpu.memory_space<vmem>>, %arg4: memref<1x128xf32, #tpu.memory_space<vmem>>, %arg5: memref<1x2x32xf32, #tpu.memory_space<vmem>>) attributes {dimension_semantics = [], scalar_prefetch = 0 : i64, scratch_operands = 0 : i64, tpu.core_type = #tpu.core_type<tc>} {
    %c0 = arith.constant 0 : index
    %c0_0 = arith.constant 0 : index
    %0 = vector.load %arg1[%c0, %c0_0] : memref<4x384xf32, #tpu.memory_space<vmem>>, vector<4x384xf32>
    %c0_1 = arith.constant 0 : index
    %c0_2 = arith.constant 0 : index
    %1 = vector.load %arg2[%c0_1, %c0_2] : memref<128x384xf32, #tpu.memory_space<vmem>>, vector<128x384xf32>
    %c0_3 = arith.constant 0 : index
    %c0_4 = arith.constant 0 : index
    %2 = vector.load %arg0[%c0_3, %c0_4] : memref<16x4xf32, #tpu.memory_space<vmem>>, vector<16x4xf32>
    %cst = arith.constant dense<0.000000e+00> : vector<16x384xf32>
    %3 = tpu.matmul %2, %0, %cst {dimension_numbers = #tpu.dot_dimension_numbers<[1], [0], [0], [1], [0, 0, 1, 1], [], []>} : vector<16x4xf32>, vector<4x384xf32>, vector<16x384xf32> -> vector<16x384xf32>
    %c0_5 = arith.constant 0 : index
    %c0_6 = arith.constant 0 : index
    %4 = vector.load %arg3[%c0_5, %c0_6] : memref<1x384xf32, #tpu.memory_space<vmem>>, vector<1x384xf32>
    %5 = vector.broadcast %4 : vector<1x384xf32> to vector<16x384xf32>
    %6 = arith.addf %3, %5 : vector<16x384xf32>
    %c0_7 = arith.constant 0 : index
    %c0_8 = arith.constant 0 : index
    %7 = vector.load %arg4[%c0_7, %c0_8] : memref<1x128xf32, #tpu.memory_space<vmem>>, vector<1x128xf32>
    %8 = vector.shape_cast %7 : vector<1x128xf32> to vector<1x128xf32>
    %9 = vector.broadcast %8 : vector<1x128xf32> to vector<2x128xf32>
    %cst_9 = arith.constant 0.000000e+00 : f32
    %10 = vector.broadcast %cst_9 : f32 to vector<2x128xf32>
    %11 = vector.extract_strided_slice %6 {offsets = [0, 0], sizes = [2, 384], strides = [1, 1]} : vector<16x384xf32> to vector<2x384xf32>
    %cst_10 = arith.constant dense<0.000000e+00> : vector<2x384xf32>
    %12 = tpu.matmul %10, %1, %cst_10 {dimension_numbers = #tpu.dot_dimension_numbers<[1], [0], [0], [1], [0, 0, 1, 1], [], []>} : vector<2x128xf32>, vector<128x384xf32>, vector<2x384xf32> -> vector<2x384xf32>
    %13 = vector.extract_strided_slice %11 {offsets = [0, 0], sizes = [2, 128], strides = [1, 1]} : vector<2x384xf32> to vector<2x128xf32>
    %14 = vector.extract_strided_slice %12 {offsets = [0, 0], sizes = [2, 128], strides = [1, 1]} : vector<2x384xf32> to vector<2x128xf32>
    %15 = arith.addf %13, %14 : vector<2x128xf32>
    %16 = arith.negf %15 : vector<2x128xf32>
    %17 = math.exp %16 : vector<2x128xf32>
    %cst_11 = arith.constant 1.000000e+00 : f32
    %18 = vector.broadcast %cst_11 : f32 to vector<2x128xf32>
    %19 = arith.addf %18, %17 : vector<2x128xf32>
    %20 = arith.divf %18, %19 : vector<2x128xf32>
    %21 = vector.extract_strided_slice %11 {offsets = [0, 128], sizes = [2, 128], strides = [1, 1]} : vector<2x384xf32> to vector<2x128xf32>
    %22 = vector.extract_strided_slice %12 {offsets = [0, 128], sizes = [2, 128], strides = [1, 1]} : vector<2x384xf32> to vector<2x128xf32>
    %23 = arith.addf %21, %22 : vector<2x128xf32>
    %24 = arith.negf %23 : vector<2x128xf32>
    %25 = math.exp %24 : vector<2x128xf32>
    %cst_12 = arith.constant 1.000000e+00 : f32
    %26 = vector.broadcast %cst_12 : f32 to vector<2x128xf32>
    %27 = arith.addf %26, %25 : vector<2x128xf32>
    %28 = arith.divf %26, %27 : vector<2x128xf32>
    %29 = vector.extract_strided_slice %11 {offsets = [0, 256], sizes = [2, 128], strides = [1, 1]} : vector<2x384xf32> to vector<2x128xf32>
    %30 = vector.extract_strided_slice %12 {offsets = [0, 256], sizes = [2, 128], strides = [1, 1]} : vector<2x384xf32> to vector<2x128xf32>
    %31 = arith.addf %30, %9 : vector<2x128xf32>
    %32 = arith.mulf %20, %31 : vector<2x128xf32>
    %33 = arith.addf %29, %32 : vector<2x128xf32>
    %34 = math.tanh %33 : vector<2x128xf32>
    %35 = arith.subf %10, %34 : vector<2x128xf32>
    %36 = arith.mulf %28, %35 : vector<2x128xf32>
    %37 = arith.addf %34, %36 : vector<2x128xf32>
    %38 = vector.extract_strided_slice %6 {offsets = [2, 0], sizes = [2, 384], strides = [1, 1]} : vector<16x384xf32> to vector<2x384xf32>
    %cst_13 = arith.constant dense<0.000000e+00> : vector<2x384xf32>
    %39 = tpu.matmul %37, %1, %cst_13 {dimension_numbers = #tpu.dot_dimension_numbers<[1], [0], [0], [1], [0, 0, 1, 1], [], []>} : vector<2x128xf32>, vector<128x384xf32>, vector<2x384xf32> -> vector<2x384xf32>
    %40 = vector.extract_strided_slice %38 {offsets = [0, 0], sizes = [2, 128], strides = [1, 1]} : vector<2x384xf32> to vector<2x128xf32>
    %41 = vector.extract_strided_slice %39 {offsets = [0, 0], sizes = [2, 128], strides = [1, 1]} : vector<2x384xf32> to vector<2x128xf32>
    %42 = arith.addf %40, %41 : vector<2x128xf32>
    %43 = arith.negf %42 : vector<2x128xf32>
    %44 = math.exp %43 : vector<2x128xf32>
    %cst_14 = arith.constant 1.000000e+00 : f32
    %45 = vector.broadcast %cst_14 : f32 to vector<2x128xf32>
    %46 = arith.addf %45, %44 : vector<2x128xf32>
    %47 = arith.divf %45, %46 : vector<2x128xf32>
    %48 = vector.extract_strided_slice %38 {offsets = [0, 128], sizes = [2, 128], strides = [1, 1]} : vector<2x384xf32> to vector<2x128xf32>
    %49 = vector.extract_strided_slice %39 {offsets = [0, 128], sizes = [2, 128], strides = [1, 1]} : vector<2x384xf32> to vector<2x128xf32>
    %50 = arith.addf %48, %49 : vector<2x128xf32>
    %51 = arith.negf %50 : vector<2x128xf32>
    %52 = math.exp %51 : vector<2x128xf32>
    %cst_15 = arith.constant 1.000000e+00 : f32
    %53 = vector.broadcast %cst_15 : f32 to vector<2x128xf32>
    %54 = arith.addf %53, %52 : vector<2x128xf32>
    %55 = arith.divf %53, %54 : vector<2x128xf32>
    %56 = vector.extract_strided_slice %38 {offsets = [0, 256], sizes = [2, 128], strides = [1, 1]} : vector<2x384xf32> to vector<2x128xf32>
    %57 = vector.extract_strided_slice %39 {offsets = [0, 256], sizes = [2, 128], strides = [1, 1]} : vector<2x384xf32> to vector<2x128xf32>
    %58 = arith.addf %57, %9 : vector<2x128xf32>
    %59 = arith.mulf %47, %58 : vector<2x128xf32>
    %60 = arith.addf %56, %59 : vector<2x128xf32>
    %61 = math.tanh %60 : vector<2x128xf32>
    %62 = arith.subf %37, %61 : vector<2x128xf32>
    %63 = arith.mulf %55, %62 : vector<2x128xf32>
    %64 = arith.addf %61, %63 : vector<2x128xf32>
    %65 = vector.extract_strided_slice %6 {offsets = [4, 0], sizes = [2, 384], strides = [1, 1]} : vector<16x384xf32> to vector<2x384xf32>
    %cst_16 = arith.constant dense<0.000000e+00> : vector<2x384xf32>
    %66 = tpu.matmul %64, %1, %cst_16 {dimension_numbers = #tpu.dot_dimension_numbers<[1], [0], [0], [1], [0, 0, 1, 1], [], []>} : vector<2x128xf32>, vector<128x384xf32>, vector<2x384xf32> -> vector<2x384xf32>
    %67 = vector.extract_strided_slice %65 {offsets = [0, 0], sizes = [2, 128], strides = [1, 1]} : vector<2x384xf32> to vector<2x128xf32>
    %68 = vector.extract_strided_slice %66 {offsets = [0, 0], sizes = [2, 128], strides = [1, 1]} : vector<2x384xf32> to vector<2x128xf32>
    %69 = arith.addf %67, %68 : vector<2x128xf32>
    %70 = arith.negf %69 : vector<2x128xf32>
    %71 = math.exp %70 : vector<2x128xf32>
    %cst_17 = arith.constant 1.000000e+00 : f32
    %72 = vector.broadcast %cst_17 : f32 to vector<2x128xf32>
    %73 = arith.addf %72, %71 : vector<2x128xf32>
    %74 = arith.divf %72, %73 : vector<2x128xf32>
    %75 = vector.extract_strided_slice %65 {offsets = [0, 128], sizes = [2, 128], strides = [1, 1]} : vector<2x384xf32> to vector<2x128xf32>
    %76 = vector.extract_strided_slice %66 {offsets = [0, 128], sizes = [2, 128], strides = [1, 1]} : vector<2x384xf32> to vector<2x128xf32>
    %77 = arith.addf %75, %76 : vector<2x128xf32>
    %78 = arith.negf %77 : vector<2x128xf32>
    %79 = math.exp %78 : vector<2x128xf32>
    %cst_18 = arith.constant 1.000000e+00 : f32
    %80 = vector.broadcast %cst_18 : f32 to vector<2x128xf32>
    %81 = arith.addf %80, %79 : vector<2x128xf32>
    %82 = arith.divf %80, %81 : vector<2x128xf32>
    %83 = vector.extract_strided_slice %65 {offsets = [0, 256], sizes = [2, 128], strides = [1, 1]} : vector<2x384xf32> to vector<2x128xf32>
    %84 = vector.extract_strided_slice %66 {offsets = [0, 256], sizes = [2, 128], strides = [1, 1]} : vector<2x384xf32> to vector<2x128xf32>
    %85 = arith.addf %84, %9 : vector<2x128xf32>
    %86 = arith.mulf %74, %85 : vector<2x128xf32>
    %87 = arith.addf %83, %86 : vector<2x128xf32>
    %88 = math.tanh %87 : vector<2x128xf32>
    %89 = arith.subf %64, %88 : vector<2x128xf32>
    %90 = arith.mulf %82, %89 : vector<2x128xf32>
    %91 = arith.addf %88, %90 : vector<2x128xf32>
    %92 = vector.extract_strided_slice %6 {offsets = [6, 0], sizes = [2, 384], strides = [1, 1]} : vector<16x384xf32> to vector<2x384xf32>
    %cst_19 = arith.constant dense<0.000000e+00> : vector<2x384xf32>
    %93 = tpu.matmul %91, %1, %cst_19 {dimension_numbers = #tpu.dot_dimension_numbers<[1], [0], [0], [1], [0, 0, 1, 1], [], []>} : vector<2x128xf32>, vector<128x384xf32>, vector<2x384xf32> -> vector<2x384xf32>
    %94 = vector.extract_strided_slice %92 {offsets = [0, 0], sizes = [2, 128], strides = [1, 1]} : vector<2x384xf32> to vector<2x128xf32>
    %95 = vector.extract_strided_slice %93 {offsets = [0, 0], sizes = [2, 128], strides = [1, 1]} : vector<2x384xf32> to vector<2x128xf32>
    %96 = arith.addf %94, %95 : vector<2x128xf32>
    %97 = arith.negf %96 : vector<2x128xf32>
    %98 = math.exp %97 : vector<2x128xf32>
    %cst_20 = arith.constant 1.000000e+00 : f32
    %99 = vector.broadcast %cst_20 : f32 to vector<2x128xf32>
    %100 = arith.addf %99, %98 : vector<2x128xf32>
    %101 = arith.divf %99, %100 : vector<2x128xf32>
    %102 = vector.extract_strided_slice %92 {offsets = [0, 128], sizes = [2, 128], strides = [1, 1]} : vector<2x384xf32> to vector<2x128xf32>
    %103 = vector.extract_strided_slice %93 {offsets = [0, 128], sizes = [2, 128], strides = [1, 1]} : vector<2x384xf32> to vector<2x128xf32>
    %104 = arith.addf %102, %103 : vector<2x128xf32>
    %105 = arith.negf %104 : vector<2x128xf32>
    %106 = math.exp %105 : vector<2x128xf32>
    %cst_21 = arith.constant 1.000000e+00 : f32
    %107 = vector.broadcast %cst_21 : f32 to vector<2x128xf32>
    %108 = arith.addf %107, %106 : vector<2x128xf32>
    %109 = arith.divf %107, %108 : vector<2x128xf32>
    %110 = vector.extract_strided_slice %92 {offsets = [0, 256], sizes = [2, 128], strides = [1, 1]} : vector<2x384xf32> to vector<2x128xf32>
    %111 = vector.extract_strided_slice %93 {offsets = [0, 256], sizes = [2, 128], strides = [1, 1]} : vector<2x384xf32> to vector<2x128xf32>
    %112 = arith.addf %111, %9 : vector<2x128xf32>
    %113 = arith.mulf %101, %112 : vector<2x128xf32>
    %114 = arith.addf %110, %113 : vector<2x128xf32>
    %115 = math.tanh %114 : vector<2x128xf32>
    %116 = arith.subf %91, %115 : vector<2x128xf32>
    %117 = arith.mulf %109, %116 : vector<2x128xf32>
    %118 = arith.addf %115, %117 : vector<2x128xf32>
    %119 = vector.extract_strided_slice %6 {offsets = [8, 0], sizes = [2, 384], strides = [1, 1]} : vector<16x384xf32> to vector<2x384xf32>
    %cst_22 = arith.constant dense<0.000000e+00> : vector<2x384xf32>
    %120 = tpu.matmul %118, %1, %cst_22 {dimension_numbers = #tpu.dot_dimension_numbers<[1], [0], [0], [1], [0, 0, 1, 1], [], []>} : vector<2x128xf32>, vector<128x384xf32>, vector<2x384xf32> -> vector<2x384xf32>
    %121 = vector.extract_strided_slice %119 {offsets = [0, 0], sizes = [2, 128], strides = [1, 1]} : vector<2x384xf32> to vector<2x128xf32>
    %122 = vector.extract_strided_slice %120 {offsets = [0, 0], sizes = [2, 128], strides = [1, 1]} : vector<2x384xf32> to vector<2x128xf32>
    %123 = arith.addf %121, %122 : vector<2x128xf32>
    %124 = arith.negf %123 : vector<2x128xf32>
    %125 = math.exp %124 : vector<2x128xf32>
    %cst_23 = arith.constant 1.000000e+00 : f32
    %126 = vector.broadcast %cst_23 : f32 to vector<2x128xf32>
    %127 = arith.addf %126, %125 : vector<2x128xf32>
    %128 = arith.divf %126, %127 : vector<2x128xf32>
    %129 = vector.extract_strided_slice %119 {offsets = [0, 128], sizes = [2, 128], strides = [1, 1]} : vector<2x384xf32> to vector<2x128xf32>
    %130 = vector.extract_strided_slice %120 {offsets = [0, 128], sizes = [2, 128], strides = [1, 1]} : vector<2x384xf32> to vector<2x128xf32>
    %131 = arith.addf %129, %130 : vector<2x128xf32>
    %132 = arith.negf %131 : vector<2x128xf32>
    %133 = math.exp %132 : vector<2x128xf32>
    %cst_24 = arith.constant 1.000000e+00 : f32
    %134 = vector.broadcast %cst_24 : f32 to vector<2x128xf32>
    %135 = arith.addf %134, %133 : vector<2x128xf32>
    %136 = arith.divf %134, %135 : vector<2x128xf32>
    %137 = vector.extract_strided_slice %119 {offsets = [0, 256], sizes = [2, 128], strides = [1, 1]} : vector<2x384xf32> to vector<2x128xf32>
    %138 = vector.extract_strided_slice %120 {offsets = [0, 256], sizes = [2, 128], strides = [1, 1]} : vector<2x384xf32> to vector<2x128xf32>
    %139 = arith.addf %138, %9 : vector<2x128xf32>
    %140 = arith.mulf %128, %139 : vector<2x128xf32>
    %141 = arith.addf %137, %140 : vector<2x128xf32>
    %142 = math.tanh %141 : vector<2x128xf32>
    %143 = arith.subf %118, %142 : vector<2x128xf32>
    %144 = arith.mulf %136, %143 : vector<2x128xf32>
    %145 = arith.addf %142, %144 : vector<2x128xf32>
    %146 = vector.extract_strided_slice %6 {offsets = [10, 0], sizes = [2, 384], strides = [1, 1]} : vector<16x384xf32> to vector<2x384xf32>
    %cst_25 = arith.constant dense<0.000000e+00> : vector<2x384xf32>
    %147 = tpu.matmul %145, %1, %cst_25 {dimension_numbers = #tpu.dot_dimension_numbers<[1], [0], [0], [1], [0, 0, 1, 1], [], []>} : vector<2x128xf32>, vector<128x384xf32>, vector<2x384xf32> -> vector<2x384xf32>
    %148 = vector.extract_strided_slice %146 {offsets = [0, 0], sizes = [2, 128], strides = [1, 1]} : vector<2x384xf32> to vector<2x128xf32>
    %149 = vector.extract_strided_slice %147 {offsets = [0, 0], sizes = [2, 128], strides = [1, 1]} : vector<2x384xf32> to vector<2x128xf32>
    %150 = arith.addf %148, %149 : vector<2x128xf32>
    %151 = arith.negf %150 : vector<2x128xf32>
    %152 = math.exp %151 : vector<2x128xf32>
    %cst_26 = arith.constant 1.000000e+00 : f32
    %153 = vector.broadcast %cst_26 : f32 to vector<2x128xf32>
    %154 = arith.addf %153, %152 : vector<2x128xf32>
    %155 = arith.divf %153, %154 : vector<2x128xf32>
    %156 = vector.extract_strided_slice %146 {offsets = [0, 128], sizes = [2, 128], strides = [1, 1]} : vector<2x384xf32> to vector<2x128xf32>
    %157 = vector.extract_strided_slice %147 {offsets = [0, 128], sizes = [2, 128], strides = [1, 1]} : vector<2x384xf32> to vector<2x128xf32>
    %158 = arith.addf %156, %157 : vector<2x128xf32>
    %159 = arith.negf %158 : vector<2x128xf32>
    %160 = math.exp %159 : vector<2x128xf32>
    %cst_27 = arith.constant 1.000000e+00 : f32
    %161 = vector.broadcast %cst_27 : f32 to vector<2x128xf32>
    %162 = arith.addf %161, %160 : vector<2x128xf32>
    %163 = arith.divf %161, %162 : vector<2x128xf32>
    %164 = vector.extract_strided_slice %146 {offsets = [0, 256], sizes = [2, 128], strides = [1, 1]} : vector<2x384xf32> to vector<2x128xf32>
    %165 = vector.extract_strided_slice %147 {offsets = [0, 256], sizes = [2, 128], strides = [1, 1]} : vector<2x384xf32> to vector<2x128xf32>
    %166 = arith.addf %165, %9 : vector<2x128xf32>
    %167 = arith.mulf %155, %166 : vector<2x128xf32>
    %168 = arith.addf %164, %167 : vector<2x128xf32>
    %169 = math.tanh %168 : vector<2x128xf32>
    %170 = arith.subf %145, %169 : vector<2x128xf32>
    %171 = arith.mulf %163, %170 : vector<2x128xf32>
    %172 = arith.addf %169, %171 : vector<2x128xf32>
    %173 = vector.extract_strided_slice %6 {offsets = [12, 0], sizes = [2, 384], strides = [1, 1]} : vector<16x384xf32> to vector<2x384xf32>
    %cst_28 = arith.constant dense<0.000000e+00> : vector<2x384xf32>
    %174 = tpu.matmul %172, %1, %cst_28 {dimension_numbers = #tpu.dot_dimension_numbers<[1], [0], [0], [1], [0, 0, 1, 1], [], []>} : vector<2x128xf32>, vector<128x384xf32>, vector<2x384xf32> -> vector<2x384xf32>
    %175 = vector.extract_strided_slice %173 {offsets = [0, 0], sizes = [2, 128], strides = [1, 1]} : vector<2x384xf32> to vector<2x128xf32>
    %176 = vector.extract_strided_slice %174 {offsets = [0, 0], sizes = [2, 128], strides = [1, 1]} : vector<2x384xf32> to vector<2x128xf32>
    %177 = arith.addf %175, %176 : vector<2x128xf32>
    %178 = arith.negf %177 : vector<2x128xf32>
    %179 = math.exp %178 : vector<2x128xf32>
    %cst_29 = arith.constant 1.000000e+00 : f32
    %180 = vector.broadcast %cst_29 : f32 to vector<2x128xf32>
    %181 = arith.addf %180, %179 : vector<2x128xf32>
    %182 = arith.divf %180, %181 : vector<2x128xf32>
    %183 = vector.extract_strided_slice %173 {offsets = [0, 128], sizes = [2, 128], strides = [1, 1]} : vector<2x384xf32> to vector<2x128xf32>
    %184 = vector.extract_strided_slice %174 {offsets = [0, 128], sizes = [2, 128], strides = [1, 1]} : vector<2x384xf32> to vector<2x128xf32>
    %185 = arith.addf %183, %184 : vector<2x128xf32>
    %186 = arith.negf %185 : vector<2x128xf32>
    %187 = math.exp %186 : vector<2x128xf32>
    %cst_30 = arith.constant 1.000000e+00 : f32
    %188 = vector.broadcast %cst_30 : f32 to vector<2x128xf32>
    %189 = arith.addf %188, %187 : vector<2x128xf32>
    %190 = arith.divf %188, %189 : vector<2x128xf32>
    %191 = vector.extract_strided_slice %173 {offsets = [0, 256], sizes = [2, 128], strides = [1, 1]} : vector<2x384xf32> to vector<2x128xf32>
    %192 = vector.extract_strided_slice %174 {offsets = [0, 256], sizes = [2, 128], strides = [1, 1]} : vector<2x384xf32> to vector<2x128xf32>
    %193 = arith.addf %192, %9 : vector<2x128xf32>
    %194 = arith.mulf %182, %193 : vector<2x128xf32>
    %195 = arith.addf %191, %194 : vector<2x128xf32>
    %196 = math.tanh %195 : vector<2x128xf32>
    %197 = arith.subf %172, %196 : vector<2x128xf32>
    %198 = arith.mulf %190, %197 : vector<2x128xf32>
    %199 = arith.addf %196, %198 : vector<2x128xf32>
    %200 = vector.extract_strided_slice %6 {offsets = [14, 0], sizes = [2, 384], strides = [1, 1]} : vector<16x384xf32> to vector<2x384xf32>
    %cst_31 = arith.constant dense<0.000000e+00> : vector<2x384xf32>
    %201 = tpu.matmul %199, %1, %cst_31 {dimension_numbers = #tpu.dot_dimension_numbers<[1], [0], [0], [1], [0, 0, 1, 1], [], []>} : vector<2x128xf32>, vector<128x384xf32>, vector<2x384xf32> -> vector<2x384xf32>
    %202 = vector.extract_strided_slice %200 {offsets = [0, 0], sizes = [2, 128], strides = [1, 1]} : vector<2x384xf32> to vector<2x128xf32>
    %203 = vector.extract_strided_slice %201 {offsets = [0, 0], sizes = [2, 128], strides = [1, 1]} : vector<2x384xf32> to vector<2x128xf32>
    %204 = arith.addf %202, %203 : vector<2x128xf32>
    %205 = arith.negf %204 : vector<2x128xf32>
    %206 = math.exp %205 : vector<2x128xf32>
    %cst_32 = arith.constant 1.000000e+00 : f32
    %207 = vector.broadcast %cst_32 : f32 to vector<2x128xf32>
    %208 = arith.addf %207, %206 : vector<2x128xf32>
    %209 = arith.divf %207, %208 : vector<2x128xf32>
    %210 = vector.extract_strided_slice %200 {offsets = [0, 128], sizes = [2, 128], strides = [1, 1]} : vector<2x384xf32> to vector<2x128xf32>
    %211 = vector.extract_strided_slice %201 {offsets = [0, 128], sizes = [2, 128], strides = [1, 1]} : vector<2x384xf32> to vector<2x128xf32>
    %212 = arith.addf %210, %211 : vector<2x128xf32>
    %213 = arith.negf %212 : vector<2x128xf32>
    %214 = math.exp %213 : vector<2x128xf32>
    %cst_33 = arith.constant 1.000000e+00 : f32
    %215 = vector.broadcast %cst_33 : f32 to vector<2x128xf32>
    %216 = arith.addf %215, %214 : vector<2x128xf32>
    %217 = arith.divf %215, %216 : vector<2x128xf32>
    %218 = vector.extract_strided_slice %200 {offsets = [0, 256], sizes = [2, 128], strides = [1, 1]} : vector<2x384xf32> to vector<2x128xf32>
    %219 = vector.extract_strided_slice %201 {offsets = [0, 256], sizes = [2, 128], strides = [1, 1]} : vector<2x384xf32> to vector<2x128xf32>
    %220 = arith.addf %219, %9 : vector<2x128xf32>
    %221 = arith.mulf %209, %220 : vector<2x128xf32>
    %222 = arith.addf %218, %221 : vector<2x128xf32>
    %223 = math.tanh %222 : vector<2x128xf32>
    %224 = arith.subf %199, %223 : vector<2x128xf32>
    %225 = arith.mulf %217, %224 : vector<2x128xf32>
    %226 = arith.addf %223, %225 : vector<2x128xf32>
    %227 = vector.extract_strided_slice %226 {offsets = [0, 0], sizes = [2, 32], strides = [1, 1]} : vector<2x128xf32> to vector<2x32xf32>
    %c0_34 = arith.constant 0 : index
    %c0_35 = arith.constant 0 : index
    %c0_36 = arith.constant 0 : index
    %228 = vector.load %arg5[%c0_34, %c0_35, %c0_36] : memref<1x2x32xf32, #tpu.memory_space<vmem>>, vector<1x2x32xf32>
    %229 = vector.shape_cast %228 : vector<1x2x32xf32> to vector<2x32xf32>
    %230 = vector.shape_cast %227 : vector<2x32xf32> to vector<1x2x32xf32>
    tpu.vector_store %arg5[%c0_34, %c0_35, %c0_36], %230 {strides = array<i32>} : memref<1x2x32xf32, #tpu.memory_space<vmem>>, vector<1x2x32xf32>,
    return
  }
}

</mosaic_0001>

<llo_original>
// kernel: tpu_custom_call.1
$region0: #{tpu_custom_call.1}
  #allocation0 [shape = 'u32[]', space=smem, size = 0x4, offset = 0x4, fixed_abs, tag = 'smem constant byte address 0x4 - core index']
  #allocation1 [shape = 'u32[144,128]{1,0:T(1,128)}', space=vmem, size = 0x12000, scoped, tag = 'internal scratch']
  %s0 = inlined_call_operand.vmem [shape: f32[16,4], index: 0, kind: input, shape index: {}]
  %s1 = inlined_call_operand.vmem [shape: f32[4,384], index: 1, kind: input, shape index: {}]
  %s2 = inlined_call_operand.hbm [shape: f32[128,384], index: 2, kind: input, shape index: {}]
  %s3 = inlined_call_operand.vmem [shape: f32[1,384], index: 3, kind: input, shape index: {}]
  %s4 = inlined_call_operand.vmem [shape: f32[1,128], index: 4, kind: input, shape index: {}]
  %s5 = inlined_call_operand.hbm [shape: f32[1,2,32], index: 5, kind: output, shape index: {}]
  %s6 = sld [smem:[#allocation0]]
  $region34: #{tpu_custom_call.1} parent=0
    _
  %s8 = ssub.s32 1, %s6
  %s9 = scalar_select 0, %s8, %s6
  $region1: #{tpu_custom_call.1} parent=0
    #allocation2 [shape = 'u8[196608]{0}', space=vmem, size = 0x30000, scoped, tag = 'input window, operand 2, single buffered']
    #allocation3 [shape = 's32[1]{0}', space=sflag, size = 0x4, scoped, tag = 'scoped memory for tpu_custom_call.1']
    #allocation4 [shape = 's32[1]{0}', space=sflag, size = 0x4, scoped, tag = 'scoped memory for tpu_custom_call.1']
    #allocation5 [shape = 'u8[1024]{0}', space=vmem, size = 0x400, scoped, tag = 'output window, operand 0, single buffered']
    %10 = vsyncpa [#allocation3], 0
    %11 = vsyncpa [#allocation4], 0
    // Predicated region
    $region2: #{tpu_custom_call.1} parent=1 // pred_check
      _
    $region3: #{tpu_custom_call.1} parent=1 // pred_check_branch
      %13 = sbr.rel (0) target = $region5
    $region4: #{tpu_custom_call.1} parent=1 // pred_region
      _
    $region5: #{tpu_custom_call.1} parent=1 // pred_fallthru
      _
    // Predicated region
    $region6: #{tpu_custom_call.1} parent=1 // pred_check
      _
    $region7: #{tpu_custom_call.1} parent=1 // pred_check_branch
      %15 = sbr.rel (0) target = $region9
    $region8: #{tpu_custom_call.1} parent=1 // pred_region
      _
    $region9: #{tpu_custom_call.1} parent=1 // pred_fallthru
      _
    // Predicated region
    $region10: #{tpu_custom_call.1} parent=1 // pred_check
      _
    $region11: #{tpu_custom_call.1} parent=1 // pred_check_branch
      %17 = sbr.rel (0) target = $region13
    $region12: #{tpu_custom_call.1} parent=1 // pred_region
      %s19 = ssub.s32 6144, 6144
      %20 = vsyncadd [#allocation3], %s19
      %s21 = sshll.u32 [#allocation2], 4
      %s22 = int_to_ptr.vmem [resolvable:$true] %s21
      %27 = dma.hbm_to_vmem [thread:$0]  %s2, 6144, %s22, [#allocation3], 384, 384, 24
    $region13: #{tpu_custom_call.1} parent=1 // pred_fallthru
      _
    // Predicated region
    $region14: #{tpu_custom_call.1} parent=1 // pred_check
      _
    $region15: #{tpu_custom_call.1} parent=1 // pred_check_branch
      %29 = sbr.rel (0) target = $region17
    $region16: #{tpu_custom_call.1} parent=1 // pred_region
      _
    $region17: #{tpu_custom_call.1} parent=1 // pred_fallthru
      _
    // Predicated region
    $region18: #{tpu_custom_call.1} parent=1 // pred_check
      _
    $region19: #{tpu_custom_call.1} parent=1 // pred_check_branch
      %31 = sbr.rel (0) target = $region21
    $region20: #{tpu_custom_call.1} parent=1 // pred_region
      _
    $region21: #{tpu_custom_call.1} parent=1 // pred_fallthru
      _
    // Predicated region
    $region22: #{tpu_custom_call.1} parent=1 // pred_check
      _
    $region23: #{tpu_custom_call.1} parent=1 // pred_check_branch
      %33 = sbr.rel (0) target = $region25
    $region24: #{tpu_custom_call.1} parent=1 // pred_region
      %34 = dma.done [#allocation3], 6144
    $region25: #{tpu_custom_call.1} parent=1 // pred_fallthru
      _
    %v35 = vld [vmem:[%s1] sm:$0xff]
    %v36 = vld [vmem:[%s1 + $0x8] sm:$0xf]
    %v37 = vld [vmem:[#allocation2] sm:$0xff]
    %v38 = vld [vmem:[#allocation2 + $0x8] sm:$0xff]
    %v39 = vld [vmem:[#allocation2 + $0x10] sm:$0xff]
    %v40 = vld [vmem:[#allocation2 + $0x18] sm:$0xff]
    %v41 = vld [vmem:[#allocation2 + $0x20] sm:$0xff]
    %v42 = vld [vmem:[#allocation2 + $0x28] sm:$0xff]
    %v43 = vld [vmem:[#allocation2 + $0x30] sm:$0xff]
    %v44 = vld [vmem:[#allocation2 + $0x38] sm:$0xff]
    %v45 = vld [vmem:[#allocation2 + $0x40] sm:$0xff]
    %v46 = vld [vmem:[#allocation2 + $0x48] sm:$0xff]
    %v47 = vld [vmem:[#allocation2 + $0x50] sm:$0xff]
    %v48 = vld [vmem:[#allocation2 + $0x58] sm:$0xff]
    %v49 = vld [vmem:[#allocation2 + $0x60] sm:$0xff]
    %v50 = vld [vmem:[#allocation2 + $0x68] sm:$0xff]
    %v51 = vld [vmem:[#allocation2 + $0x70] sm:$0xff]
    %v52 = vld [vmem:[#allocation2 + $0x78] sm:$0xff]
    %v53 = vld [vmem:[#allocation2 + $0x80] sm:$0xff]
    %v54 = vld [vmem:[#allocation2 + $0x88] sm:$0xff]
    %v55 = vld [vmem:[#allocation2 + $0x90] sm:$0xff]
    %v56 = vld [vmem:[#allocation2 + $0x98] sm:$0xff]
    %v57 = vld [vmem:[#allocation2 + $0xa0] sm:$0xff]
    %v58 = vld [vmem:[#allocation2 + $0xa8] sm:$0xff]
    %v59 = vld [vmem:[#allocation2 + $0xb0] sm:$0xff]
    %v60 = vld [vmem:[#allocation2 + $0xb8] sm:$0xff]
    %v61 = vld [vmem:[#allocation2 + $0xc0] sm:$0xff]
    %v62 = vld [vmem:[#allocation2 + $0xc8] sm:$0xff]
    %v63 = vld [vmem:[#allocation2 + $0xd0] sm:$0xff]
    %v64 = vld [vmem:[#allocation2 + $0xd8] sm:$0xff]
    %v65 = vld [vmem:[#allocation2 + $0xe0] sm:$0xff]
    %v66 = vld [vmem:[#allocation2 + $0xe8] sm:$0xff]
    %v67 = vld [vmem:[#allocation2 + $0xf0] sm:$0xff]
    %v68 = vld [vmem:[#allocation2 + $0xf8] sm:$0xff]
    %v69 = vld [vmem:[#allocation2 + $0x100] sm:$0xff]
    %v70 = vld [vmem:[#allocation2 + $0x108] sm:$0xff]
    %v71 = vld [vmem:[#allocation2 + $0x110] sm:$0xff]
    %v72 = vld [vmem:[#allocation2 + $0x118] sm:$0xff]
    %v73 = vld [vmem:[#allocation2 + $0x120] sm:$0xff]
    %v74 = vld [vmem:[#allocation2 + $0x128] sm:$0xff]
    %v75 = vld [vmem:[#allocation2 + $0x130] sm:$0xff]
    %v76 = vld [vmem:[#allocation2 + $0x138] sm:$0xff]
    %v77 = vld [vmem:[#allocation2 + $0x140] sm:$0xff]
    %v78 = vld [vmem:[#allocation2 + $0x148] sm:$0xff]
    %v79 = vld [vmem:[#allocation2 + $0x150] sm:$0xff]
    %v80 = vld [vmem:[#allocation2 + $0x158] sm:$0xff]
    %v81 = vld [vmem:[#allocation2 + $0x160] sm:$0xff]
    %v82 = vld [vmem:[#allocation2 + $0x168] sm:$0xff]
    %v83 = vld [vmem:[#allocation2 + $0x170] sm:$0xff]
    %v84 = vld [vmem:[#allocation2 + $0x178] sm:$0xff]
    %v85 = vld [vmem:[%s0] sm:$0xff]
    %v86 = vld [vmem:[%s0 + $0x8] sm:$0xff]
    %v87 = vld [vmem:[%s3] sm:$0x7]
    %v89 = vlaneseq
    %v90 = vshrl.u32 %v89, 7
    %v91 = vsub.s32 0, %v90
    %v92 = vrot.slane %v87, %v91
    %v93 = vlaneseq
    %v94 = vshrl.u32 %v93, 7
    %v95 = vsub.s32 1, %v94
    %v96 = vrot.slane %v87, %v95
    %v97 = vlaneseq
    %v98 = vshrl.u32 %v97, 7
    %v99 = vsub.s32 2, %v98
    %v100 = vrot.slane %v87, %v99
    %v106 = vcombine.high %v35, %v35
    %vm107 = vcmask 31744
    %v109 = vsel %vm107, %v85, 0
    %v112 = vsel %vm107, %v86, 0
    %vm114 = vcmask 1043456
    %v115 = vsel %vm114, %v35, 0
    %v117 = vsel %vm114, %v106, 0
    %v119 = vsel %vm114, %v36, 0
    %121 = vmatprep.subr.mxu0 0.0
    %122 = vmatpush1.msra.mxu0 0.0
    %123 = vmatprep.subr.mxu0 0.0
    %124 = vmatpush1.msra.mxu0 0.0
    %125 = vmatprep.subr.mxu0 0.0
    %126 = vmatpush1.msra.mxu0 0.0
    %127 = vmatprep.subr.mxu0 0.0
    %128 = vmatpush1.msra.mxu0 0.0
    %129 = vmatprep.subr.mxu0 0.0
    %130 = vmatpush1.msra.mxu0 0.0
    %131 = vmatprep.subr.mxu0 0.0
    %132 = vmatpush1.msra.mxu0 0.0
    %133 = vmatprep.subr.mxu0 0.0
    %134 = vmatpush1.msra.mxu0 0.0
    %135 = vmatprep.subr.mxu0 0.0
    %136 = vmatpush1.msra.mxu0 0.0
    %137 = vmatprep.subr.mxu0 0.0
    %138 = vmatpush1.msra.mxu0 0.0
    %139 = vmatprep.subr.mxu0 0.0
    %140 = vmatpush1.msra.mxu0 0.0
    %141 = vmatprep.subr.mxu0 0.0
    %142 = vmatpush1.msra.mxu0 0.0
    %143 = vmatprep.subr.mxu0 0.0
    %144 = vmatpush1.msra.mxu0 0.0
    %145 = vmatprep.subr.mxu0 0.0
    %146 = vmatpush1.msra.mxu0 0.0
    %147 = vmatprep.subr.mxu0 0.0
    %148 = vmatpush1.msra.mxu0 0.0
    %149 = vmatprep.subr.mxu0 0.0
    %150 = vmatpush1.msra.mxu0 0.0
    %151 = vmatprep.subr.mxu0 %v117
    %152 = vmatpush1.msra.mxu0 %v115
    %153 = vmatprep.subr.mxu0 0.0
    %154 = vmatpush2.msra.mxu0 0.0
    %155 = vmatprep.subr.mxu0 0.0
    %156 = vmatpush2.msra.mxu0 0.0
    %157 = vmatprep.subr.mxu0 0.0
    %158 = vmatpush2.msra.mxu0 0.0
    %159 = vmatprep.subr.mxu0 0.0
    %160 = vmatpush2.msra.mxu0 0.0
    %161 = vmatprep.subr.mxu0 0.0
    %162 = vmatpush2.msra.mxu0 0.0
    %163 = vmatprep.subr.mxu0 0.0
    %164 = vmatpush2.msra.mxu0 0.0
    %165 = vmatprep.subr.mxu0 0.0
    %166 = vmatpush2.msra.mxu0 0.0
    %167 = vmatprep.subr.mxu0 0.0
    %168 = vmatpush2.msra.mxu0 0.0
    %169 = vmatprep.subr.mxu0 0.0
    %170 = vmatpush2.msra.mxu0 0.0
    %171 = vmatprep.subr.mxu0 0.0
    %172 = vmatpush2.msra.mxu0 0.0
    %173 = vmatprep.subr.mxu0 0.0
    %174 = vmatpush2.msra.mxu0 0.0
    %175 = vmatprep.subr.mxu0 0.0
    %176 = vmatpush2.msra.mxu0 0.0
    %177 = vmatprep.subr.mxu0 0.0
    %178 = vmatpush2.msra.mxu0 0.0
    %179 = vmatprep.subr.mxu0 0.0
    %180 = vmatpush2.msra.mxu0 0.0
    %181 = vmatprep.subr.mxu0 0.0
    %182 = vmatpush2.msra.mxu0 0.0
    %183 = vmatprep.subr.mxu0 0.0
    %184 = vmatpush2.msra.mxu0 0.0
    %185 = vmatprep.mubr.f32.mxu0 0.0
    %186 = vmatmul.mubr.f32.gmra.mxu0 %v109
    %v187 = vpop.f32.mrf.mxu0
    %v188 = vadd.f32 %v92, %v187
    %v189 = vpop.f32.mrf.mxu0
    %v190 = vadd.f32 %v96, %v189
    %191 = vmatprep.mubr.f32.mxu0 0.0
    %192 = vmatmul.mubr.f32.gmra.mxu0 %v112
    %v193 = vpop.f32.mrf.mxu0
    %v194 = vadd.f32 %v92, %v193
    %v195 = vpop.f32.mrf.mxu0
    %v196 = vadd.f32 %v96, %v195
    %197 = vdwg.mxu0
    %198 = vmatprep.subr.mxu0 0.0
    %199 = vmatpush1.msra.mxu0 0.0
    %200 = vmatprep.subr.mxu0 0.0
    %201 = vmatpush1.msra.mxu0 0.0
    %202 = vmatprep.subr.mxu0 0.0
    %203 = vmatpush1.msra.mxu0 0.0
    %204 = vmatprep.subr.mxu0 0.0
    %205 = vmatpush1.msra.mxu0 0.0
    %206 = vmatprep.subr.mxu0 0.0
    %207 = vmatpush1.msra.mxu0 0.0
    %208 = vmatprep.subr.mxu0 0.0
    %209 = vmatpush1.msra.mxu0 0.0
    %210 = vmatprep.subr.mxu0 0.0
    %211 = vmatpush1.msra.mxu0 0.0
    %212 = vmatprep.subr.mxu0 0.0
    %213 = vmatpush1.msra.mxu0 0.0
    %214 = vmatprep.subr.mxu0 0.0
    %215 = vmatpush1.msra.mxu0 0.0
    %216 = vmatprep.subr.mxu0 0.0
    %217 = vmatpush1.msra.mxu0 0.0
    %218 = vmatprep.subr.mxu0 0.0
    %219 = vmatpush1.msra.mxu0 0.0
    %220 = vmatprep.subr.mxu0 0.0
    %221 = vmatpush1.msra.mxu0 0.0
    %222 = vmatprep.subr.mxu0 0.0
    %223 = vmatpush1.msra.mxu0 0.0
    %224 = vmatprep.subr.mxu0 0.0
    %225 = vmatpush1.msra.mxu0 0.0
    %226 = vmatprep.subr.mxu0 0.0
    %227 = vmatpush1.msra.mxu0 0.0
    %228 = vmatprep.subr.mxu0 0.0
    %229 = vmatpush1.msra.mxu0 %v119
    %230 = vmatprep.subr.mxu0 0.0
    %231 = vmatpush2.msra.mxu0 0.0
    %232 = vmatprep.subr.mxu0 0.0
    %233 = vmatpush2.msra.mxu0 0.0
    %234 = vmatprep.subr.mxu0 0.0
    %235 = vmatpush2.msra.mxu0 0.0
    %236 = vmatprep.subr.mxu0 0.0
    %237 = vmatpush2.msra.mxu0 0.0
    %238 = vmatprep.subr.mxu0 0.0
    %239 = vmatpush2.msra.mxu0 0.0
    %240 = vmatprep.subr.mxu0 0.0
    %241 = vmatpush2.msra.mxu0 0.0
    %242 = vmatprep.subr.mxu0 0.0
    %243 = vmatpush2.msra.mxu0 0.0
    %244 = vmatprep.subr.mxu0 0.0
    %245 = vmatpush2.msra.mxu0 0.0
    %246 = vmatprep.subr.mxu0 0.0
    %247 = vmatpush2.msra.mxu0 0.0
    %248 = vmatprep.subr.mxu0 0.0
    %249 = vmatpush2.msra.mxu0 0.0
    %250 = vmatprep.subr.mxu0 0.0
    %251 = vmatpush2.msra.mxu0 0.0
    %252 = vmatprep.subr.mxu0 0.0
    %253 = vmatpush2.msra.mxu0 0.0
    %254 = vmatprep.subr.mxu0 0.0
    %255 = vmatpush2.msra.mxu0 0.0
    %256 = vmatprep.subr.mxu0 0.0
    %257 = vmatpush2.msra.mxu0 0.0
    %258 = vmatprep.subr.mxu0 0.0
    %259 = vmatpush2.msra.mxu0 0.0
    %260 = vmatprep.subr.mxu0 0.0
    %261 = vmatpush2.msra.mxu0 0.0
    %262 = vmatprep.mubr.f32.mxu0 0.0
    %263 = vmatmul.mubr.f32.gmra.mxu0 %v109
    %v264 = vpop.f32.mrf.mxu0
    %v265 = vadd.f32 %v100, %v264
    %v266 = vpop.f32.mrf.mxu0
    %267 = vmatprep.mubr.f32.mxu0 0.0
    %268 = vmatmul.mubr.f32.gmra.mxu0 %v112
    %v269 = vpop.f32.mrf.mxu0
    %v270 = vadd.f32 %v100, %v269
    %v271 = vpop.f32.mrf.mxu0
    %272 = vdwg.mxu0
    %v273 = vld [vmem:[%s4] sm:$0x1]
    %v275 = vlaneseq
    %v276 = vshrl.u32 %v275, 7
    %v277 = vsub.s32 0, %v276
    %v278 = vrot.slane %v273, %v277
    %280 = vmatprep.subr.mxu0 %v83
    %281 = vmatpush1.msra.mxu0 %v82
    %282 = vmatprep.subr.mxu0 %v80
    %283 = vmatpush1.msra.mxu0 %v79
    %284 = vmatprep.subr.mxu0 %v77
    %285 = vmatpush1.msra.mxu0 %v76
    %286 = vmatprep.subr.mxu0 %v74
    %287 = vmatpush1.msra.mxu0 %v73
    %288 = vmatprep.subr.mxu0 %v71
    %289 = vmatpush1.msra.mxu0 %v70
    %290 = vmatprep.subr.mxu0 %v68
    %291 = vmatpush1.msra.mxu0 %v67
    %292 = vmatprep.subr.mxu0 %v65
    %293 = vmatpush1.msra.mxu0 %v64
    %294 = vmatprep.subr.mxu0 %v62
    %295 = vmatpush1.msra.mxu0 %v61
    %296 = vmatprep.subr.mxu0 %v59
    %297 = vmatpush1.msra.mxu0 %v58
    %298 = vmatprep.subr.mxu0 %v56
    %299 = vmatpush1.msra.mxu0 %v55
    %300 = vmatprep.subr.mxu0 %v53
    %301 = vmatpush1.msra.mxu0 %v52
    %302 = vmatprep.subr.mxu0 %v50
    %303 = vmatpush1.msra.mxu0 %v49
    %304 = vmatprep.subr.mxu0 %v47
    %305 = vmatpush1.msra.mxu0 %v46
    %306 = vmatprep.subr.mxu0 %v44
    %307 = vmatpush1.msra.mxu0 %v43
    %308 = vmatprep.subr.mxu0 %v41
    %309 = vmatpush1.msra.mxu0 %v40
    %310 = vmatprep.subr.mxu0 %v38
    %311 = vmatpush1.msra.mxu0 %v37
    %312 = vmatprep.subr.mxu0 0.0
    %313 = vmatpush2.msra.mxu0 0.0
    %314 = vmatprep.subr.mxu0 0.0
    %315 = vmatpush2.msra.mxu0 0.0
    %316 = vmatprep.subr.mxu0 0.0
    %317 = vmatpush2.msra.mxu0 0.0
    %318 = vmatprep.subr.mxu0 0.0
    %319 = vmatpush2.msra.mxu0 0.0
    %320 = vmatprep.subr.mxu0 0.0
    %321 = vmatpush2.msra.mxu0 0.0
    %322 = vmatprep.subr.mxu0 0.0
    %323 = vmatpush2.msra.mxu0 0.0
    %324 = vmatprep.subr.mxu0 0.0
    %325 = vmatpush2.msra.mxu0 0.0
    %326 = vmatprep.subr.mxu0 0.0
    %327 = vmatpush2.msra.mxu0 0.0
    %328 = vmatprep.subr.mxu0 0.0
    %329 = vmatpush2.msra.mxu0 0.0
    %330 = vmatprep.subr.mxu0 0.0
    %331 = vmatpush2.msra.mxu0 0.0
    %332 = vmatprep.subr.mxu0 0.0
    %333 = vmatpush2.msra.mxu0 0.0
    %334 = vmatprep.subr.mxu0 0.0
    %335 = vmatpush2.msra.mxu0 0.0
    %336 = vmatprep.subr.mxu0 0.0
    %337 = vmatpush2.msra.mxu0 0.0
    %338 = vmatprep.subr.mxu0 0.0
    %339 = vmatpush2.msra.mxu0 0.0
    %340 = vmatprep.subr.mxu0 0.0
    %341 = vmatpush2.msra.mxu0 0.0
    %342 = vmatprep.subr.mxu0 0.0
    %343 = vmatpush2.msra.mxu0 0.0
    %344 = vmatprep.mubr.f32.mxu0 0.0
    %345 = vmatmul.mubr.f32.gmra.mxu0 0.0
    %v346 = vpop.f32.mrf.mxu0
    %v347 = vadd.f32 0.0, %v346
    %v348 = vpop.f32.mrf.mxu0
    %v349 = vadd.f32 0.0, %v348
    %350 = vdwg.mxu0
    %351 = vmatprep.subr.mxu0 0.0
    %352 = vmatpush1.msra.mxu0 %v84
    %353 = vmatprep.subr.mxu0 0.0
    %354 = vmatpush1.msra.mxu0 %v81
    %355 = vmatprep.subr.mxu0 0.0
    %356 = vmatpush1.msra.mxu0 %v78
    %357 = vmatprep.subr.mxu0 0.0
    %358 = vmatpush1.msra.mxu0 %v75
    %359 = vmatprep.subr.mxu0 0.0
    %360 = vmatpush1.msra.mxu0 %v72
    %361 = vmatprep.subr.mxu0 0.0
    %362 = vmatpush1.msra.mxu0 %v69
    %363 = vmatprep.subr.mxu0 0.0
    %364 = vmatpush1.msra.mxu0 %v66
    %365 = vmatprep.subr.mxu0 0.0
    %366 = vmatpush1.msra.mxu0 %v63
    %367 = vmatprep.subr.mxu0 0.0
    %368 = vmatpush1.msra.mxu0 %v60
    %369 = vmatprep.subr.mxu0 0.0
    %370 = vmatpush1.msra.mxu0 %v57
    %371 = vmatprep.subr.mxu0 0.0
    %372 = vmatpush1.msra.mxu0 %v54
    %373 = vmatprep.subr.mxu0 0.0
    %374 = vmatpush1.msra.mxu0 %v51
    %375 = vmatprep.subr.mxu0 0.0
    %376 = vmatpush1.msra.mxu0 %v48
    %377 = vmatprep.subr.mxu0 0.0
    %378 = vmatpush1.msra.mxu0 %v45
    %379 = vmatprep.subr.mxu0 0.0
    %380 = vmatpush1.msra.mxu0 %v42
    %381 = vmatprep.subr.mxu0 0.0
    %382 = vmatpush1.msra.mxu0 %v39
    %383 = vmatprep.subr.mxu0 0.0
    %384 = vmatpush2.msra.mxu0 0.0
    %385 = vmatprep.subr.mxu0 0.0
    %386 = vmatpush2.msra.mxu0 0.0
    %387 = vmatprep.subr.mxu0 0.0
    %388 = vmatpush2.msra.mxu0 0.0
    %389 = vmatprep.subr.mxu0 0.0
    %390 = vmatpush2.msra.mxu0 0.0
    %391 = vmatprep.subr.mxu0 0.0
    %392 = vmatpush2.msra.mxu0 0.0
    %393 = vmatprep.subr.mxu0 0.0
    %394 = vmatpush2.msra.mxu0 0.0
    %395 = vmatprep.subr.mxu0 0.0
    %396 = vmatpush2.msra.mxu0 0.0
    %397 = vmatprep.subr.mxu0 0.0
    %398 = vmatpush2.msra.mxu0 0.0
    %399 = vmatprep.subr.mxu0 0.0
    %400 = vmatpush2.msra.mxu0 0.0
    %401 = vmatprep.subr.mxu0 0.0
    %402 = vmatpush2.msra.mxu0 0.0
    %403 = vmatprep.subr.mxu0 0.0
    %404 = vmatpush2.msra.mxu0 0.0
    %405 = vmatprep.subr.mxu0 0.0
    %406 = vmatpush2.msra.mxu0 0.0
    %407 = vmatprep.subr.mxu0 0.0
    %408 = vmatpush2.msra.mxu0 0.0
    %409 = vmatprep.subr.mxu0 0.0
    %410 = vmatpush2.msra.mxu0 0.0
    %411 = vmatprep.subr.mxu0 0.0
    %412 = vmatpush2.msra.mxu0 0.0
    %413 = vmatprep.subr.mxu0 0.0
    %414 = vmatpush2.msra.mxu0 0.0
    %415 = vmatprep.mubr.f32.mxu0 0.0
    %416 = vmatmul.mubr.f32.gmra.mxu0 0.0
    %v417 = vpop.f32.mrf.mxu0
    %v418 = vadd.f32 0.0, %v417
    %v419 = vpop.f32.mrf.mxu0
    %420 = vdwg.mxu0
    %v421 = vadd.f32 %v188, %v347
    %v422 = vxor.u32 %v421, 2147483648
    %v423 = vmul.f32 %v422, 1.442695
    %v424 = vpow.pop %v423
    %v425 = vadd.f32 %v424, 1.0
    %v426 = vrcp.pop %v425
    %v427 = vmul.f32 1.0, %v426
    %v428 = vadd.f32 %v190, %v349
    %v429 = vxor.u32 %v428, 2147483648
    %v430 = vmul.f32 %v429, 1.442695
    %v431 = vpow.pop %v430
    %v432 = vadd.f32 %v431, 1.0
    %v433 = vrcp.pop %v432
    %v434 = vmul.f32 1.0, %v433
    %v435 = vadd.f32 %v418, %v278
    %v436 = vmul.f32 %v427, %v435
    %v437 = vadd.f32 %v265, %v436
    %v438 = vtanh.pop %v437
    %v439 = vsub.f32 0.0, %v438
    %v440 = vmul.f32 %v434, %v439
    %v441 = vadd.f32 %v438, %v440
    %442 = vmatprep.subr.mxu0 %v83
    %443 = vmatpush1.msra.mxu0 %v82
    %444 = vmatprep.subr.mxu0 %v80
    %445 = vmatpush1.msra.mxu0 %v79
    %446 = vmatprep.subr.mxu0 %v77
    %447 = vmatpush1.msra.mxu0 %v76
    %448 = vmatprep.subr.mxu0 %v74
    %449 = vmatpush1.msra.mxu0 %v73
    %450 = vmatprep.subr.mxu0 %v71
    %451 = vmatpush1.msra.mxu0 %v70
    %452 = vmatprep.subr.mxu0 %v68
    %453 = vmatpush1.msra.mxu0 %v67
    %454 = vmatprep.subr.mxu0 %v65
    %455 = vmatpush1.msra.mxu0 %v64
    %456 = vmatprep.subr.mxu0 %v62
    %457 = vmatpush1.msra.mxu0 %v61
    %458 = vmatprep.subr.mxu0 %v59
    %459 = vmatpush1.msra.mxu0 %v58
    %460 = vmatprep.subr.mxu0 %v56
    %461 = vmatpush1.msra.mxu0 %v55
    %462 = vmatprep.subr.mxu0 %v53
    %463 = vmatpush1.msra.mxu0 %v52
    %464 = vmatprep.subr.mxu0 %v50
    %465 = vmatpush1.msra.mxu0 %v49
    %466 = vmatprep.subr.mxu0 %v47
    %467 = vmatpush1.msra.mxu0 %v46
    %468 = vmatprep.subr.mxu0 %v44
    %469 = vmatpush1.msra.mxu0 %v43
    %470 = vmatprep.subr.mxu0 %v41
    %471 = vmatpush1.msra.mxu0 %v40
    %472 = vmatprep.subr.mxu0 %v38
    %473 = vmatpush1.msra.mxu0 %v37
    %474 = vmatprep.subr.mxu0 0.0
    %475 = vmatpush2.msra.mxu0 0.0
    %476 = vmatprep.subr.mxu0 0.0
    %477 = vmatpush2.msra.mxu0 0.0
    %478 = vmatprep.subr.mxu0 0.0
    %479 = vmatpush2.msra.mxu0 0.0
    %480 = vmatprep.subr.mxu0 0.0
    %481 = vmatpush2.msra.mxu0 0.0
    %482 = vmatprep.subr.mxu0 0.0
    %483 = vmatpush2.msra.mxu0 0.0
    %484 = vmatprep.subr.mxu0 0.0
    %485 = vmatpush2.msra.mxu0 0.0
    %486 = vmatprep.subr.mxu0 0.0
    %487 = vmatpush2.msra.mxu0 0.0
    %488 = vmatprep.subr.mxu0 0.0
    %489 = vmatpush2.msra.mxu0 0.0
    %490 = vmatprep.subr.mxu0 0.0
    %491 = vmatpush2.msra.mxu0 0.0
    %492 = vmatprep.subr.mxu0 0.0
    %493 = vmatpush2.msra.mxu0 0.0
    %494 = vmatprep.subr.mxu0 0.0
    %495 = vmatpush2.msra.mxu0 0.0
    %496 = vmatprep.subr.mxu0 0.0
    %497 = vmatpush2.msra.mxu0 0.0
    %498 = vmatprep.subr.mxu0 0.0
    %499 = vmatpush2.msra.mxu0 0.0
    %500 = vmatprep.subr.mxu0 0.0
    %501 = vmatpush2.msra.mxu0 0.0
    %502 = vmatprep.subr.mxu0 0.0
    %503 = vmatpush2.msra.mxu0 0.0
    %504 = vmatprep.subr.mxu0 0.0
    %505 = vmatpush2.msra.mxu0 0.0
    %506 = vmatprep.mubr.f32.mxu0 0.0
    %507 = vmatmul.mubr.f32.gmra.mxu0 %v441
    %v508 = vpop.f32.mrf.mxu0
    %v509 = vadd.f32 0.0, %v508
    %v510 = vpop.f32.mrf.mxu0
    %v511 = vadd.f32 0.0, %v510
    %512 = vdwg.mxu0
    %513 = vmatprep.subr.mxu0 0.0
    %514 = vmatpush1.msra.mxu0 %v84
    %515 = vmatprep.subr.mxu0 0.0
    %516 = vmatpush1.msra.mxu0 %v81
    %517 = vmatprep.subr.mxu0 0.0
    %518 = vmatpush1.msra.mxu0 %v78
    %519 = vmatprep.subr.mxu0 0.0
    %520 = vmatpush1.msra.mxu0 %v75
    %521 = vmatprep.subr.mxu0 0.0
    %522 = vmatpush1.msra.mxu0 %v72
    %523 = vmatprep.subr.mxu0 0.0
    %524 = vmatpush1.msra.mxu0 %v69
    %525 = vmatprep.subr.mxu0 0.0
    %526 = vmatpush1.msra.mxu0 %v66
    %527 = vmatprep.subr.mxu0 0.0
    %528 = vmatpush1.msra.mxu0 %v63
    %529 = vmatprep.subr.mxu0 0.0
    %530 = vmatpush1.msra.mxu0 %v60
    %531 = vmatprep.subr.mxu0 0.0
    %532 = vmatpush1.msra.mxu0 %v57
    %533 = vmatprep.subr.mxu0 0.0
    %534 = vmatpush1.msra.mxu0 %v54
    %535 = vmatprep.subr.mxu0 0.0
    %536 = vmatpush1.msra.mxu0 %v51
    %537 = vmatprep.subr.mxu0 0.0
    %538 = vmatpush1.msra.mxu0 %v48
    %539 = vmatprep.subr.mxu0 0.0
    %540 = vmatpush1.msra.mxu0 %v45
    %541 = vmatprep.subr.mxu0 0.0
    %542 = vmatpush1.msra.mxu0 %v42
    %543 = vmatprep.subr.mxu0 0.0
    %544 = vmatpush1.msra.mxu0 %v39
    %545 = vmatprep.subr.mxu0 0.0
    %546 = vmatpush2.msra.mxu0 0.0
    %547 = vmatprep.subr.mxu0 0.0
    %548 = vmatpush2.msra.mxu0 0.0
    %549 = vmatprep.subr.mxu0 0.0
    %550 = vmatpush2.msra.mxu0 0.0
    %551 = vmatprep.subr.mxu0 0.0
    %552 = vmatpush2.msra.mxu0 0.0
    %553 = vmatprep.subr.mxu0 0.0
    %554 = vmatpush2.msra.mxu0 0.0
    %555 = vmatprep.subr.mxu0 0.0
    %556 = vmatpush2.msra.mxu0 0.0
    %557 = vmatprep.subr.mxu0 0.0
    %558 = vmatpush2.msra.mxu0 0.0
    %559 = vmatprep.subr.mxu0 0.0
    %560 = vmatpush2.msra.mxu0 0.0
    %561 = vmatprep.subr.mxu0 0.0
    %562 = vmatpush2.msra.mxu0 0.0
    %563 = vmatprep.subr.mxu0 0.0
    %564 = vmatpush2.msra.mxu0 0.0
    %565 = vmatprep.subr.mxu0 0.0
    %566 = vmatpush2.msra.mxu0 0.0
    %567 = vmatprep.subr.mxu0 0.0
    %568 = vmatpush2.msra.mxu0 0.0
    %569 = vmatprep.subr.mxu0 0.0
    %570 = vmatpush2.msra.mxu0 0.0
    %571 = vmatprep.subr.mxu0 0.0
    %572 = vmatpush2.msra.mxu0 0.0
    %573 = vmatprep.subr.mxu0 0.0
    %574 = vmatpush2.msra.mxu0 0.0
    %575 = vmatprep.subr.mxu0 0.0
    %576 = vmatpush2.msra.mxu0 0.0
    %577 = vmatprep.mubr.f32.mxu0 0.0
    %578 = vmatmul.mubr.f32.gmra.mxu0 %v441
    %v579 = vpop.f32.mrf.mxu0
    %v580 = vadd.f32 0.0, %v579
    %v581 = vpop.f32.mrf.mxu0
    %582 = vdwg.mxu0
    %v584 = vrot.slane %v509, 6
    %v586 = vadd.f32 %v188, %v584
    %v587 = vxor.u32 %v586, 2147483648
    %v588 = vmul.f32 %v587, 1.442695
    %v589 = vpow.pop %v588
    %v590 = vadd.f32 %v589, 1.0
    %v591 = vrcp.pop %v590
    %v592 = vmul.f32 1.0, %v591
    %v594 = vrot.slane %v511, 6
    %v596 = vadd.f32 %v190, %v594
    %v597 = vxor.u32 %v596, 2147483648
    %v598 = vmul.f32 %v597, 1.442695
    %v599 = vpow.pop %v598
    %v600 = vadd.f32 %v599, 1.0
    %v601 = vrcp.pop %v600
    %v602 = vmul.f32 1.0, %v601
    %v603 = vadd.f32 %v580, %v278
    %v605 = vrot.slane %v603, 6
    %v607 = vmul.f32 %v592, %v605
    %v608 = vadd.f32 %v265, %v607
    %v609 = vtanh.pop %v608
    %v611 = vrot.slane %v609, 2
    %v613 = vsub.f32 %v441, %v611
    %v615 = vrot.slane %v613, 6
    %v617 = vmul.f32 %v602, %v615
    %v618 = vadd.f32 %v609, %v617
    %v620 = vrot.slane %v618, 2
    %622 = vmatprep.subr.mxu0 %v83
    %623 = vmatpush1.msra.mxu0 %v82
    %624 = vmatprep.subr.mxu0 %v80
    %625 = vmatpush1.msra.mxu0 %v79
    %626 = vmatprep.subr.mxu0 %v77
    %627 = vmatpush1.msra.mxu0 %v76
    %628 = vmatprep.subr.mxu0 %v74
    %629 = vmatpush1.msra.mxu0 %v73
    %630 = vmatprep.subr.mxu0 %v71
    %631 = vmatpush1.msra.mxu0 %v70
    %632 = vmatprep.subr.mxu0 %v68
    %633 = vmatpush1.msra.mxu0 %v67
    %634 = vmatprep.subr.mxu0 %v65
    %635 = vmatpush1.msra.mxu0 %v64
    %636 = vmatprep.subr.mxu0 %v62
    %637 = vmatpush1.msra.mxu0 %v61
    %638 = vmatprep.subr.mxu0 %v59
    %639 = vmatpush1.msra.mxu0 %v58
    %640 = vmatprep.subr.mxu0 %v56
    %641 = vmatpush1.msra.mxu0 %v55
    %642 = vmatprep.subr.mxu0 %v53
    %643 = vmatpush1.msra.mxu0 %v52
    %644 = vmatprep.subr.mxu0 %v50
    %645 = vmatpush1.msra.mxu0 %v49
    %646 = vmatprep.subr.mxu0 %v47
    %647 = vmatpush1.msra.mxu0 %v46
    %648 = vmatprep.subr.mxu0 %v44
    %649 = vmatpush1.msra.mxu0 %v43
    %650 = vmatprep.subr.mxu0 %v41
    %651 = vmatpush1.msra.mxu0 %v40
    %652 = vmatprep.subr.mxu0 %v38
    %653 = vmatpush1.msra.mxu0 %v37
    %654 = vmatprep.subr.mxu0 0.0
    %655 = vmatpush2.msra.mxu0 0.0
    %656 = vmatprep.subr.mxu0 0.0
    %657 = vmatpush2.msra.mxu0 0.0
    %658 = vmatprep.subr.mxu0 0.0
    %659 = vmatpush2.msra.mxu0 0.0
    %660 = vmatprep.subr.mxu0 0.0
    %661 = vmatpush2.msra.mxu0 0.0
    %662 = vmatprep.subr.mxu0 0.0
    %663 = vmatpush2.msra.mxu0 0.0
    %664 = vmatprep.subr.mxu0 0.0
    %665 = vmatpush2.msra.mxu0 0.0
    %666 = vmatprep.subr.mxu0 0.0
    %667 = vmatpush2.msra.mxu0 0.0
    %668 = vmatprep.subr.mxu0 0.0
    %669 = vmatpush2.msra.mxu0 0.0
    %670 = vmatprep.subr.mxu0 0.0
    %671 = vmatpush2.msra.mxu0 0.0
    %672 = vmatprep.subr.mxu0 0.0
    %673 = vmatpush2.msra.mxu0 0.0
    %674 = vmatprep.subr.mxu0 0.0
    %675 = vmatpush2.msra.mxu0 0.0
    %676 = vmatprep.subr.mxu0 0.0
    %677 = vmatpush2.msra.mxu0 0.0
    %678 = vmatprep.subr.mxu0 0.0
    %679 = vmatpush2.msra.mxu0 0.0
    %680 = vmatprep.subr.mxu0 0.0
    %681 = vmatpush2.msra.mxu0 0.0
    %682 = vmatprep.subr.mxu0 0.0
    %683 = vmatpush2.msra.mxu0 0.0
    %684 = vmatprep.subr.mxu0 0.0
    %685 = vmatpush2.msra.mxu0 0.0
    %686 = vmatprep.mubr.f32.mxu0 0.0
    %687 = vmatmul.mubr.f32.gmra.mxu0 %v620
    %v688 = vpop.f32.mrf.mxu0
    %v689 = vadd.f32 0.0, %v688
    %v690 = vpop.f32.mrf.mxu0
    %v691 = vadd.f32 0.0, %v690
    %692 = vdwg.mxu0
    %693 = vmatprep.subr.mxu0 0.0
    %694 = vmatpush1.msra.mxu0 %v84
    %695 = vmatprep.subr.mxu0 0.0
    %696 = vmatpush1.msra.mxu0 %v81
    %697 = vmatprep.subr.mxu0 0.0
    %698 = vmatpush1.msra.mxu0 %v78
    %699 = vmatprep.subr.mxu0 0.0
    %700 = vmatpush1.msra.mxu0 %v75
    %701 = vmatprep.subr.mxu0 0.0
    %702 = vmatpush1.msra.mxu0 %v72
    %703 = vmatprep.subr.mxu0 0.0
    %704 = vmatpush1.msra.mxu0 %v69
    %705 = vmatprep.subr.mxu0 0.0
    %706 = vmatpush1.msra.mxu0 %v66
    %707 = vmatprep.subr.mxu0 0.0
    %708 = vmatpush1.msra.mxu0 %v63
    %709 = vmatprep.subr.mxu0 0.0
    %710 = vmatpush1.msra.mxu0 %v60
    %711 = vmatprep.subr.mxu0 0.0
    %712 = vmatpush1.msra.mxu0 %v57
    %713 = vmatprep.subr.mxu0 0.0
    %714 = vmatpush1.msra.mxu0 %v54
    %715 = vmatprep.subr.mxu0 0.0
    %716 = vmatpush1.msra.mxu0 %v51
    %717 = vmatprep.subr.mxu0 0.0
    %718 = vmatpush1.msra.mxu0 %v48
    %719 = vmatprep.subr.mxu0 0.0
    %720 = vmatpush1.msra.mxu0 %v45
    %721 = vmatprep.subr.mxu0 0.0
    %722 = vmatpush1.msra.mxu0 %v42
    %723 = vmatprep.subr.mxu0 0.0
    %724 = vmatpush1.msra.mxu0 %v39
    %725 = vmatprep.subr.mxu0 0.0
    %726 = vmatpush2.msra.mxu0 0.0
    %727 = vmatprep.subr.mxu0 0.0
    %728 = vmatpush2.msra.mxu0 0.0
    %729 = vmatprep.subr.mxu0 0.0
    %730 = vmatpush2.msra.mxu0 0.0
    %731 = vmatprep.subr.mxu0 0.0
    %732 = vmatpush2.msra.mxu0 0.0
    %733 = vmatprep.subr.mxu0 0.0
    %734 = vmatpush2.msra.mxu0 0.0
    %735 = vmatprep.subr.mxu0 0.0
    %736 = vmatpush2.msra.mxu0 0.0
    %737 = vmatprep.subr.mxu0 0.0
    %738 = vmatpush2.msra.mxu0 0.0
    %739 = vmatprep.subr.mxu0 0.0
    %740 = vmatpush2.msra.mxu0 0.0
    %741 = vmatprep.subr.mxu0 0.0
    %742 = vmatpush2.msra.mxu0 0.0
    %743 = vmatprep.subr.mxu0 0.0
    %744 = vmatpush2.msra.mxu0 0.0
    %745 = vmatprep.subr.mxu0 0.0
    %746 = vmatpush2.msra.mxu0 0.0
    %747 = vmatprep.subr.mxu0 0.0
    %748 = vmatpush2.msra.mxu0 0.0
    %749 = vmatprep.subr.mxu0 0.0
    %750 = vmatpush2.msra.mxu0 0.0
    %751 = vmatprep.subr.mxu0 0.0
    %752 = vmatpush2.msra.mxu0 0.0
    %753 = vmatprep.subr.mxu0 0.0
    %754 = vmatpush2.msra.mxu0 0.0
    %755 = vmatprep.subr.mxu0 0.0
    %756 = vmatpush2.msra.mxu0 0.0
    %757 = vmatprep.mubr.f32.mxu0 0.0
    %758 = vmatmul.mubr.f32.gmra.mxu0 %v620
    %v759 = vpop.f32.mrf.mxu0
    %v760 = vadd.f32 0.0, %v759
    %v761 = vpop.f32.mrf.mxu0
    %762 = vdwg.mxu0
    %v764 = vrot.slane %v689, 4
    %v766 = vadd.f32 %v188, %v764
    %v767 = vxor.u32 %v766, 2147483648
    %v768 = vmul.f32 %v767, 1.442695
    %v769 = vpow.pop %v768
    %v770 = vadd.f32 %v769, 1.0
    %v771 = vrcp.pop %v770
    %v772 = vmul.f32 1.0, %v771
    %v774 = vrot.slane %v691, 4
    %v776 = vadd.f32 %v190, %v774
    %v777 = vxor.u32 %v776, 2147483648
    %v778 = vmul.f32 %v777, 1.442695
    %v779 = vpow.pop %v778
    %v780 = vadd.f32 %v779, 1.0
    %v781 = vrcp.pop %v780
    %v782 = vmul.f32 1.0, %v781
    %v783 = vadd.f32 %v760, %v278
    %v785 = vrot.slane %v783, 4
    %v787 = vmul.f32 %v772, %v785
    %v788 = vadd.f32 %v265, %v787
    %v789 = vtanh.pop %v788
    %v791 = vrot.slane %v789, 2
    %v793 = vsub.f32 %v618, %v791
    %v795 = vrot.slane %v793, 6
    %v797 = vmul.f32 %v782, %v795
    %v798 = vadd.f32 %v789, %v797
    %v800 = vrot.slane %v798, 4
    %802 = vmatprep.subr.mxu0 %v83
    %803 = vmatpush1.msra.mxu0 %v82
    %804 = vmatprep.subr.mxu0 %v80
    %805 = vmatpush1.msra.mxu0 %v79
    %806 = vmatprep.subr.mxu0 %v77
    %807 = vmatpush1.msra.mxu0 %v76
    %808 = vmatprep.subr.mxu0 %v74
    %809 = vmatpush1.msra.mxu0 %v73
    %810 = vmatprep.subr.mxu0 %v71
    %811 = vmatpush1.msra.mxu0 %v70
    %812 = vmatprep.subr.mxu0 %v68
    %813 = vmatpush1.msra.mxu0 %v67
    %814 = vmatprep.subr.mxu0 %v65
    %815 = vmatpush1.msra.mxu0 %v64
    %816 = vmatprep.subr.mxu0 %v62
    %817 = vmatpush1.msra.mxu0 %v61
    %818 = vmatprep.subr.mxu0 %v59
    %819 = vmatpush1.msra.mxu0 %v58
    %820 = vmatprep.subr.mxu0 %v56
    %821 = vmatpush1.msra.mxu0 %v55
    %822 = vmatprep.subr.mxu0 %v53
    %823 = vmatpush1.msra.mxu0 %v52
    %824 = vmatprep.subr.mxu0 %v50
    %825 = vmatpush1.msra.mxu0 %v49
    %826 = vmatprep.subr.mxu0 %v47
    %827 = vmatpush1.msra.mxu0 %v46
    %828 = vmatprep.subr.mxu0 %v44
    %829 = vmatpush1.msra.mxu0 %v43
    %830 = vmatprep.subr.mxu0 %v41
    %831 = vmatpush1.msra.mxu0 %v40
    %832 = vmatprep.subr.mxu0 %v38
    %833 = vmatpush1.msra.mxu0 %v37
    %834 = vmatprep.subr.mxu0 0.0
    %835 = vmatpush2.msra.mxu0 0.0
    %836 = vmatprep.subr.mxu0 0.0
    %837 = vmatpush2.msra.mxu0 0.0
    %838 = vmatprep.subr.mxu0 0.0
    %839 = vmatpush2.msra.mxu0 0.0
    %840 = vmatprep.subr.mxu0 0.0
    %841 = vmatpush2.msra.mxu0 0.0
    %842 = vmatprep.subr.mxu0 0.0
    %843 = vmatpush2.msra.mxu0 0.0
    %844 = vmatprep.subr.mxu0 0.0
    %845 = vmatpush2.msra.mxu0 0.0
    %846 = vmatprep.subr.mxu0 0.0
    %847 = vmatpush2.msra.mxu0 0.0
    %848 = vmatprep.subr.mxu0 0.0
    %849 = vmatpush2.msra.mxu0 0.0
    %850 = vmatprep.subr.mxu0 0.0
    %851 = vmatpush2.msra.mxu0 0.0
    %852 = vmatprep.subr.mxu0 0.0
    %853 = vmatpush2.msra.mxu0 0.0
    %854 = vmatprep.subr.mxu0 0.0
    %855 = vmatpush2.msra.mxu0 0.0
    %856 = vmatprep.subr.mxu0 0.0
    %857 = vmatpush2.msra.mxu0 0.0
    %858 = vmatprep.subr.mxu0 0.0
    %859 = vmatpush2.msra.mxu0 0.0
    %860 = vmatprep.subr.mxu0 0.0
    %861 = vmatpush2.msra.mxu0 0.0
    %862 = vmatprep.subr.mxu0 0.0
    %863 = vmatpush2.msra.mxu0 0.0
    %864 = vmatprep.subr.mxu0 0.0
    %865 = vmatpush2.msra.mxu0 0.0
    %866 = vmatprep.mubr.f32.mxu0 0.0
    %867 = vmatmul.mubr.f32.gmra.mxu0 %v800
    %v868 = vpop.f32.mrf.mxu0
    %v869 = vadd.f32 0.0, %v868
    %v870 = vpop.f32.mrf.mxu0
    %v871 = vadd.f32 0.0, %v870
    %872 = vdwg.mxu0
    %873 = vmatprep.subr.mxu0 0.0
    %874 = vmatpush1.msra.mxu0 %v84
    %875 = vmatprep.subr.mxu0 0.0
    %876 = vmatpush1.msra.mxu0 %v81
    %877 = vmatprep.subr.mxu0 0.0
    %878 = vmatpush1.msra.mxu0 %v78
    %879 = vmatprep.subr.mxu0 0.0
    %880 = vmatpush1.msra.mxu0 %v75
    %881 = vmatprep.subr.mxu0 0.0
    %882 = vmatpush1.msra.mxu0 %v72
    %883 = vmatprep.subr.mxu0 0.0
    %884 = vmatpush1.msra.mxu0 %v69
    %885 = vmatprep.subr.mxu0 0.0
    %886 = vmatpush1.msra.mxu0 %v66
    %887 = vmatprep.subr.mxu0 0.0
    %888 = vmatpush1.msra.mxu0 %v63
    %889 = vmatprep.subr.mxu0 0.0
    %890 = vmatpush1.msra.mxu0 %v60
    %891 = vmatprep.subr.mxu0 0.0
    %892 = vmatpush1.msra.mxu0 %v57
    %893 = vmatprep.subr.mxu0 0.0
    %894 = vmatpush1.msra.mxu0 %v54
    %895 = vmatprep.subr.mxu0 0.0
    %896 = vmatpush1.msra.mxu0 %v51
    %897 = vmatprep.subr.mxu0 0.0
    %898 = vmatpush1.msra.mxu0 %v48
    %899 = vmatprep.subr.mxu0 0.0
    %900 = vmatpush1.msra.mxu0 %v45
    %901 = vmatprep.subr.mxu0 0.0
    %902 = vmatpush1.msra.mxu0 %v42
    %903 = vmatprep.subr.mxu0 0.0
    %904 = vmatpush1.msra.mxu0 %v39
    %905 = vmatprep.subr.mxu0 0.0
    %906 = vmatpush2.msra.mxu0 0.0
    %907 = vmatprep.subr.mxu0 0.0
    %908 = vmatpush2.msra.mxu0 0.0
    %909 = vmatprep.subr.mxu0 0.0
    %910 = vmatpush2.msra.mxu0 0.0
    %911 = vmatprep.subr.mxu0 0.0
    %912 = vmatpush2.msra.mxu0 0.0
    %913 = vmatprep.subr.mxu0 0.0
    %914 = vmatpush2.msra.mxu0 0.0
    %915 = vmatprep.subr.mxu0 0.0
    %916 = vmatpush2.msra.mxu0 0.0
    %917 = vmatprep.subr.mxu0 0.0
    %918 = vmatpush2.msra.mxu0 0.0
    %919 = vmatprep.subr.mxu0 0.0
    %920 = vmatpush2.msra.mxu0 0.0
    %921 = vmatprep.subr.mxu0 0.0
    %922 = vmatpush2.msra.mxu0 0.0
    %923 = vmatprep.subr.mxu0 0.0
    %924 = vmatpush2.msra.mxu0 0.0
    %925 = vmatprep.subr.mxu0 0.0
    %926 = vmatpush2.msra.mxu0 0.0
    %927 = vmatprep.subr.mxu0 0.0
    %928 = vmatpush2.msra.mxu0 0.0
    %929 = vmatprep.subr.mxu0 0.0
    %930 = vmatpush2.msra.mxu0 0.0
    %931 = vmatprep.subr.mxu0 0.0
    %932 = vmatpush2.msra.mxu0 0.0
    %933 = vmatprep.subr.mxu0 0.0
    %934 = vmatpush2.msra.mxu0 0.0
    %935 = vmatprep.subr.mxu0 0.0
    %936 = vmatpush2.msra.mxu0 0.0
    %937 = vmatprep.mubr.f32.mxu0 0.0
    %938 = vmatmul.mubr.f32.gmra.mxu0 %v800
    %v939 = vpop.f32.mrf.mxu0
    %v940 = vadd.f32 0.0, %v939
    %v941 = vpop.f32.mrf.mxu0
    %942 = vdwg.mxu0
    %v944 = vrot.slane %v869, 2
    %v946 = vadd.f32 %v188, %v944
    %v947 = vxor.u32 %v946, 2147483648
    %v948 = vmul.f32 %v947, 1.442695
    %v949 = vpow.pop %v948
    %v950 = vadd.f32 %v949, 1.0
    %v951 = vrcp.pop %v950
    %v952 = vmul.f32 1.0, %v951
    %v954 = vrot.slane %v871, 2
    %v956 = vadd.f32 %v190, %v954
    %v957 = vxor.u32 %v956, 2147483648
    %v958 = vmul.f32 %v957, 1.442695
    %v959 = vpow.pop %v958
    %v960 = vadd.f32 %v959, 1.0
    %v961 = vrcp.pop %v960
    %v962 = vmul.f32 1.0, %v961
    %v963 = vadd.f32 %v940, %v278
    %v965 = vrot.slane %v963, 2
    %v967 = vmul.f32 %v952, %v965
    %v968 = vadd.f32 %v265, %v967
    %v969 = vtanh.pop %v968
    %v971 = vrot.slane %v969, 2
    %v973 = vsub.f32 %v798, %v971
    %v975 = vrot.slane %v973, 6
    %v977 = vmul.f32 %v962, %v975
    %v978 = vadd.f32 %v969, %v977
    %v980 = vrot.slane %v978, 6
    %982 = vmatprep.subr.mxu0 %v83
    %983 = vmatpush1.msra.mxu0 %v82
    %984 = vmatprep.subr.mxu0 %v80
    %985 = vmatpush1.msra.mxu0 %v79
    %986 = vmatprep.subr.mxu0 %v77
    %987 = vmatpush1.msra.mxu0 %v76
    %988 = vmatprep.subr.mxu0 %v74
    %989 = vmatpush1.msra.mxu0 %v73
    %990 = vmatprep.subr.mxu0 %v71
    %991 = vmatpush1.msra.mxu0 %v70
    %992 = vmatprep.subr.mxu0 %v68
    %993 = vmatpush1.msra.mxu0 %v67
    %994 = vmatprep.subr.mxu0 %v65
    %995 = vmatpush1.msra.mxu0 %v64
    %996 = vmatprep.subr.mxu0 %v62
    %997 = vmatpush1.msra.mxu0 %v61
    %998 = vmatprep.subr.mxu0 %v59
    %999 = vmatpush1.msra.mxu0 %v58
    %1000 = vmatprep.subr.mxu0 %v56
    %1001 = vmatpush1.msra.mxu0 %v55
    %1002 = vmatprep.subr.mxu0 %v53
    %1003 = vmatpush1.msra.mxu0 %v52
    %1004 = vmatprep.subr.mxu0 %v50
    %1005 = vmatpush1.msra.mxu0 %v49
    %1006 = vmatprep.subr.mxu0 %v47
    %1007 = vmatpush1.msra.mxu0 %v46
    %1008 = vmatprep.subr.mxu0 %v44
    %1009 = vmatpush1.msra.mxu0 %v43
    %1010 = vmatprep.subr.mxu0 %v41
    %1011 = vmatpush1.msra.mxu0 %v40
    %1012 = vmatprep.subr.mxu0 %v38
    %1013 = vmatpush1.msra.mxu0 %v37
    %1014 = vmatprep.subr.mxu0 0.0
    %1015 = vmatpush2.msra.mxu0 0.0
    %1016 = vmatprep.subr.mxu0 0.0
    %1017 = vmatpush2.msra.mxu0 0.0
    %1018 = vmatprep.subr.mxu0 0.0
    %1019 = vmatpush2.msra.mxu0 0.0
    %1020 = vmatprep.subr.mxu0 0.0
    %1021 = vmatpush2.msra.mxu0 0.0
    %1022 = vmatprep.subr.mxu0 0.0
    %1023 = vmatpush2.msra.mxu0 0.0
    %1024 = vmatprep.subr.mxu0 0.0
    %1025 = vmatpush2.msra.mxu0 0.0
    %1026 = vmatprep.subr.mxu0 0.0
    %1027 = vmatpush2.msra.mxu0 0.0
    %1028 = vmatprep.subr.mxu0 0.0
    %1029 = vmatpush2.msra.mxu0 0.0
    %1030 = vmatprep.subr.mxu0 0.0
    %1031 = vmatpush2.msra.mxu0 0.0
    %1032 = vmatprep.subr.mxu0 0.0
    %1033 = vmatpush2.msra.mxu0 0.0
    %1034 = vmatprep.subr.mxu0 0.0
    %1035 = vmatpush2.msra.mxu0 0.0
    %1036 = vmatprep.subr.mxu0 0.0
    %1037 = vmatpush2.msra.mxu0 0.0
    %1038 = vmatprep.subr.mxu0 0.0
    %1039 = vmatpush2.msra.mxu0 0.0
    %1040 = vmatprep.subr.mxu0 0.0
    %1041 = vmatpush2.msra.mxu0 0.0
    %1042 = vmatprep.subr.mxu0 0.0
    %1043 = vmatpush2.msra.mxu0 0.0
    %1044 = vmatprep.subr.mxu0 0.0
    %1045 = vmatpush2.msra.mxu0 0.0
    %1046 = vmatprep.mubr.f32.mxu0 0.0
    %1047 = vmatmul.mubr.f32.gmra.mxu0 %v980
    %v1048 = vpop.f32.mrf.mxu0
    %v1049 = vadd.f32 0.0, %v1048
    %v1050 = vpop.f32.mrf.mxu0
    %v1051 = vadd.f32 0.0, %v1050
    %1052 = vdwg.mxu0
    %1053 = vmatprep.subr.mxu0 0.0
    %1054 = vmatpush1.msra.mxu0 %v84
    %1055 = vmatprep.subr.mxu0 0.0
    %1056 = vmatpush1.msra.mxu0 %v81
    %1057 = vmatprep.subr.mxu0 0.0
    %1058 = vmatpush1.msra.mxu0 %v78
    %1059 = vmatprep.subr.mxu0 0.0
    %1060 = vmatpush1.msra.mxu0 %v75
    %1061 = vmatprep.subr.mxu0 0.0
    %1062 = vmatpush1.msra.mxu0 %v72
    %1063 = vmatprep.subr.mxu0 0.0
    %1064 = vmatpush1.msra.mxu0 %v69
    %1065 = vmatprep.subr.mxu0 0.0
    %1066 = vmatpush1.msra.mxu0 %v66
    %1067 = vmatprep.subr.mxu0 0.0
    %1068 = vmatpush1.msra.mxu0 %v63
    %1069 = vmatprep.subr.mxu0 0.0
    %1070 = vmatpush1.msra.mxu0 %v60
    %1071 = vmatprep.subr.mxu0 0.0
    %1072 = vmatpush1.msra.mxu0 %v57
    %1073 = vmatprep.subr.mxu0 0.0
    %1074 = vmatpush1.msra.mxu0 %v54
    %1075 = vmatprep.subr.mxu0 0.0
    %1076 = vmatpush1.msra.mxu0 %v51
    %1077 = vmatprep.subr.mxu0 0.0
    %1078 = vmatpush1.msra.mxu0 %v48
    %1079 = vmatprep.subr.mxu0 0.0
    %1080 = vmatpush1.msra.mxu0 %v45
    %1081 = vmatprep.subr.mxu0 0.0
    %1082 = vmatpush1.msra.mxu0 %v42
    %1083 = vmatprep.subr.mxu0 0.0
    %1084 = vmatpush1.msra.mxu0 %v39
    %1085 = vmatprep.subr.mxu0 0.0
    %1086 = vmatpush2.msra.mxu0 0.0
    %1087 = vmatprep.subr.mxu0 0.0
    %1088 = vmatpush2.msra.mxu0 0.0
    %1089 = vmatprep.subr.mxu0 0.0
    %1090 = vmatpush2.msra.mxu0 0.0
    %1091 = vmatprep.subr.mxu0 0.0
    %1092 = vmatpush2.msra.mxu0 0.0
    %1093 = vmatprep.subr.mxu0 0.0
    %1094 = vmatpush2.msra.mxu0 0.0
    %1095 = vmatprep.subr.mxu0 0.0
    %1096 = vmatpush2.msra.mxu0 0.0
    %1097 = vmatprep.subr.mxu0 0.0
    %1098 = vmatpush2.msra.mxu0 0.0
    %1099 = vmatprep.subr.mxu0 0.0
    %1100 = vmatpush2.msra.mxu0 0.0
    %1101 = vmatprep.subr.mxu0 0.0
    %1102 = vmatpush2.msra.mxu0 0.0
    %1103 = vmatprep.subr.mxu0 0.0
    %1104 = vmatpush2.msra.mxu0 0.0
    %1105 = vmatprep.subr.mxu0 0.0
    %1106 = vmatpush2.msra.mxu0 0.0
    %1107 = vmatprep.subr.mxu0 0.0
    %1108 = vmatpush2.msra.mxu0 0.0
    %1109 = vmatprep.subr.mxu0 0.0
    %1110 = vmatpush2.msra.mxu0 0.0
    %1111 = vmatprep.subr.mxu0 0.0
    %1112 = vmatpush2.msra.mxu0 0.0
    %1113 = vmatprep.subr.mxu0 0.0
    %1114 = vmatpush2.msra.mxu0 0.0
    %1115 = vmatprep.subr.mxu0 0.0
    %1116 = vmatpush2.msra.mxu0 0.0
    %1117 = vmatprep.mubr.f32.mxu0 0.0
    %1118 = vmatmul.mubr.f32.gmra.mxu0 %v980
    %v1119 = vpop.f32.mrf.mxu0
    %v1120 = vadd.f32 0.0, %v1119
    %v1121 = vpop.f32.mrf.mxu0
    %1122 = vdwg.mxu0
    %v1123 = vadd.f32 %v194, %v1049
    %v1124 = vxor.u32 %v1123, 2147483648
    %v1125 = vmul.f32 %v1124, 1.442695
    %v1126 = vpow.pop %v1125
    %v1127 = vadd.f32 %v1126, 1.0
    %v1128 = vrcp.pop %v1127
    %v1129 = vmul.f32 1.0, %v1128
    %v1130 = vadd.f32 %v196, %v1051
    %v1131 = vxor.u32 %v1130, 2147483648
    %v1132 = vmul.f32 %v1131, 1.442695
    %v1133 = vpow.pop %v1132
    %v1134 = vadd.f32 %v1133, 1.0
    %v1135 = vrcp.pop %v1134
    %v1136 = vmul.f32 1.0, %v1135
    %v1137 = vadd.f32 %v1120, %v278
    %v1138 = vmul.f32 %v1129, %v1137
    %v1139 = vadd.f32 %v270, %v1138
    %v1140 = vtanh.pop %v1139
    %v1142 = vrot.slane %v1140, 2
    %v1144 = vsub.f32 %v978, %v1142
    %v1146 = vrot.slane %v1144, 6
    %v1148 = vmul.f32 %v1136, %v1146
    %v1149 = vadd.f32 %v1140, %v1148
    %1150 = vmatprep.subr.mxu0 %v83
    %1151 = vmatpush1.msra.mxu0 %v82
    %1152 = vmatprep.subr.mxu0 %v80
    %1153 = vmatpush1.msra.mxu0 %v79
    %1154 = vmatprep.subr.mxu0 %v77
    %1155 = vmatpush1.msra.mxu0 %v76
    %1156 = vmatprep.subr.mxu0 %v74
    %1157 = vmatpush1.msra.mxu0 %v73
    %1158 = vmatprep.subr.mxu0 %v71
    %1159 = vmatpush1.msra.mxu0 %v70
    %1160 = vmatprep.subr.mxu0 %v68
    %1161 = vmatpush1.msra.mxu0 %v67
    %1162 = vmatprep.subr.mxu0 %v65
    %1163 = vmatpush1.msra.mxu0 %v64
    %1164 = vmatprep.subr.mxu0 %v62
    %1165 = vmatpush1.msra.mxu0 %v61
    %1166 = vmatprep.subr.mxu0 %v59
    %1167 = vmatpush1.msra.mxu0 %v58
    %1168 = vmatprep.subr.mxu0 %v56
    %1169 = vmatpush1.msra.mxu0 %v55
    %1170 = vmatprep.subr.mxu0 %v53
    %1171 = vmatpush1.msra.mxu0 %v52
    %1172 = vmatprep.subr.mxu0 %v50
    %1173 = vmatpush1.msra.mxu0 %v49
    %1174 = vmatprep.subr.mxu0 %v47
    %1175 = vmatpush1.msra.mxu0 %v46
    %1176 = vmatprep.subr.mxu0 %v44
    %1177 = vmatpush1.msra.mxu0 %v43
    %1178 = vmatprep.subr.mxu0 %v41
    %1179 = vmatpush1.msra.mxu0 %v40
    %1180 = vmatprep.subr.mxu0 %v38
    %1181 = vmatpush1.msra.mxu0 %v37
    %1182 = vmatprep.subr.mxu0 0.0
    %1183 = vmatpush2.msra.mxu0 0.0
    %1184 = vmatprep.subr.mxu0 0.0
    %1185 = vmatpush2.msra.mxu0 0.0
    %1186 = vmatprep.subr.mxu0 0.0
    %1187 = vmatpush2.msra.mxu0 0.0
    %1188 = vmatprep.subr.mxu0 0.0
    %1189 = vmatpush2.msra.mxu0 0.0
    %1190 = vmatprep.subr.mxu0 0.0
    %1191 = vmatpush2.msra.mxu0 0.0
    %1192 = vmatprep.subr.mxu0 0.0
    %1193 = vmatpush2.msra.mxu0 0.0
    %1194 = vmatprep.subr.mxu0 0.0
    %1195 = vmatpush2.msra.mxu0 0.0
    %1196 = vmatprep.subr.mxu0 0.0
    %1197 = vmatpush2.msra.mxu0 0.0
    %1198 = vmatprep.subr.mxu0 0.0
    %1199 = vmatpush2.msra.mxu0 0.0
    %1200 = vmatprep.subr.mxu0 0.0
    %1201 = vmatpush2.msra.mxu0 0.0
    %1202 = vmatprep.subr.mxu0 0.0
    %1203 = vmatpush2.msra.mxu0 0.0
    %1204 = vmatprep.subr.mxu0 0.0
    %1205 = vmatpush2.msra.mxu0 0.0
    %1206 = vmatprep.subr.mxu0 0.0
    %1207 = vmatpush2.msra.mxu0 0.0
    %1208 = vmatprep.subr.mxu0 0.0
    %1209 = vmatpush2.msra.mxu0 0.0
    %1210 = vmatprep.subr.mxu0 0.0
    %1211 = vmatpush2.msra.mxu0 0.0
    %1212 = vmatprep.subr.mxu0 0.0
    %1213 = vmatpush2.msra.mxu0 0.0
    %1214 = vmatprep.mubr.f32.mxu0 0.0
    %1215 = vmatmul.mubr.f32.gmra.mxu0 %v1149
    %v1216 = vpop.f32.mrf.mxu0
    %v1217 = vadd.f32 0.0, %v1216
    %v1218 = vpop.f32.mrf.mxu0
    %v1219 = vadd.f32 0.0, %v1218
    %1220 = vdwg.mxu0
    %1221 = vmatprep.subr.mxu0 0.0
    %1222 = vmatpush1.msra.mxu0 %v84
    %1223 = vmatprep.subr.mxu0 0.0
    %1224 = vmatpush1.msra.mxu0 %v81
    %1225 = vmatprep.subr.mxu0 0.0
    %1226 = vmatpush1.msra.mxu0 %v78
    %1227 = vmatprep.subr.mxu0 0.0
    %1228 = vmatpush1.msra.mxu0 %v75
    %1229 = vmatprep.subr.mxu0 0.0
    %1230 = vmatpush1.msra.mxu0 %v72
    %1231 = vmatprep.subr.mxu0 0.0
    %1232 = vmatpush1.msra.mxu0 %v69
    %1233 = vmatprep.subr.mxu0 0.0
    %1234 = vmatpush1.msra.mxu0 %v66
    %1235 = vmatprep.subr.mxu0 0.0
    %1236 = vmatpush1.msra.mxu0 %v63
    %1237 = vmatprep.subr.mxu0 0.0
    %1238 = vmatpush1.msra.mxu0 %v60
    %1239 = vmatprep.subr.mxu0 0.0
    %1240 = vmatpush1.msra.mxu0 %v57
    %1241 = vmatprep.subr.mxu0 0.0
    %1242 = vmatpush1.msra.mxu0 %v54
    %1243 = vmatprep.subr.mxu0 0.0
    %1244 = vmatpush1.msra.mxu0 %v51
    %1245 = vmatprep.subr.mxu0 0.0
    %1246 = vmatpush1.msra.mxu0 %v48
    %1247 = vmatprep.subr.mxu0 0.0
    %1248 = vmatpush1.msra.mxu0 %v45
    %1249 = vmatprep.subr.mxu0 0.0
    %1250 = vmatpush1.msra.mxu0 %v42
    %1251 = vmatprep.subr.mxu0 0.0
    %1252 = vmatpush1.msra.mxu0 %v39
    %1253 = vmatprep.subr.mxu0 0.0
    %1254 = vmatpush2.msra.mxu0 0.0
    %1255 = vmatprep.subr.mxu0 0.0
    %1256 = vmatpush2.msra.mxu0 0.0
    %1257 = vmatprep.subr.mxu0 0.0
    %1258 = vmatpush2.msra.mxu0 0.0
    %1259 = vmatprep.subr.mxu0 0.0
    %1260 = vmatpush2.msra.mxu0 0.0
    %1261 = vmatprep.subr.mxu0 0.0
    %1262 = vmatpush2.msra.mxu0 0.0
    %1263 = vmatprep.subr.mxu0 0.0
    %1264 = vmatpush2.msra.mxu0 0.0
    %1265 = vmatprep.subr.mxu0 0.0
    %1266 = vmatpush2.msra.mxu0 0.0
    %1267 = vmatprep.subr.mxu0 0.0
    %1268 = vmatpush2.msra.mxu0 0.0
    %1269 = vmatprep.subr.mxu0 0.0
    %1270 = vmatpush2.msra.mxu0 0.0
    %1271 = vmatprep.subr.mxu0 0.0
    %1272 = vmatpush2.msra.mxu0 0.0
    %1273 = vmatprep.subr.mxu0 0.0
    %1274 = vmatpush2.msra.mxu0 0.0
    %1275 = vmatprep.subr.mxu0 0.0
    %1276 = vmatpush2.msra.mxu0 0.0
    %1277 = vmatprep.subr.mxu0 0.0
    %1278 = vmatpush2.msra.mxu0 0.0
    %1279 = vmatprep.subr.mxu0 0.0
    %1280 = vmatpush2.msra.mxu0 0.0
    %1281 = vmatprep.subr.mxu0 0.0
    %1282 = vmatpush2.msra.mxu0 0.0
    %1283 = vmatprep.subr.mxu0 0.0
    %1284 = vmatpush2.msra.mxu0 0.0
    %1285 = vmatprep.mubr.f32.mxu0 0.0
    %1286 = vmatmul.mubr.f32.gmra.mxu0 %v1149
    %v1287 = vpop.f32.mrf.mxu0
    %v1288 = vadd.f32 0.0, %v1287
    %v1289 = vpop.f32.mrf.mxu0
    %1290 = vdwg.mxu0
    %v1292 = vrot.slane %v1217, 6
    %v1294 = vadd.f32 %v194, %v1292
    %v1295 = vxor.u32 %v1294, 2147483648
    %v1296 = vmul.f32 %v1295, 1.442695
    %v1297 = vpow.pop %v1296
    %v1298 = vadd.f32 %v1297, 1.0
    %v1299 = vrcp.pop %v1298
    %v1300 = vmul.f32 1.0, %v1299
    %v1302 = vrot.slane %v1219, 6
    %v1304 = vadd.f32 %v196, %v1302
    %v1305 = vxor.u32 %v1304, 2147483648
    %v1306 = vmul.f32 %v1305, 1.442695
    %v1307 = vpow.pop %v1306
    %v1308 = vadd.f32 %v1307, 1.0
    %v1309 = vrcp.pop %v1308
    %v1310 = vmul.f32 1.0, %v1309
    %v1311 = vadd.f32 %v1288, %v278
    %v1313 = vrot.slane %v1311, 6
    %v1315 = vmul.f32 %v1300, %v1313
    %v1316 = vadd.f32 %v270, %v1315
    %v1317 = vtanh.pop %v1316
    %v1319 = vrot.slane %v1317, 2
    %v1321 = vsub.f32 %v1149, %v1319
    %v1323 = vrot.slane %v1321, 6
    %v1325 = vmul.f32 %v1310, %v1323
    %v1326 = vadd.f32 %v1317, %v1325
    %v1328 = vrot.slane %v1326, 2
    %1330 = vmatprep.subr.mxu0 %v83
    %1331 = vmatpush1.msra.mxu0 %v82
    %1332 = vmatprep.subr.mxu0 %v80
    %1333 = vmatpush1.msra.mxu0 %v79
    %1334 = vmatprep.subr.mxu0 %v77
    %1335 = vmatpush1.msra.mxu0 %v76
    %1336 = vmatprep.subr.mxu0 %v74
    %1337 = vmatpush1.msra.mxu0 %v73
    %1338 = vmatprep.subr.mxu0 %v71
    %1339 = vmatpush1.msra.mxu0 %v70
    %1340 = vmatprep.subr.mxu0 %v68
    %1341 = vmatpush1.msra.mxu0 %v67
    %1342 = vmatprep.subr.mxu0 %v65
    %1343 = vmatpush1.msra.mxu0 %v64
    %1344 = vmatprep.subr.mxu0 %v62
    %1345 = vmatpush1.msra.mxu0 %v61
    %1346 = vmatprep.subr.mxu0 %v59
    %1347 = vmatpush1.msra.mxu0 %v58
    %1348 = vmatprep.subr.mxu0 %v56
    %1349 = vmatpush1.msra.mxu0 %v55
    %1350 = vmatprep.subr.mxu0 %v53
    %1351 = vmatpush1.msra.mxu0 %v52
    %1352 = vmatprep.subr.mxu0 %v50
    %1353 = vmatpush1.msra.mxu0 %v49
    %1354 = vmatprep.subr.mxu0 %v47
    %1355 = vmatpush1.msra.mxu0 %v46
    %1356 = vmatprep.subr.mxu0 %v44
    %1357 = vmatpush1.msra.mxu0 %v43
    %1358 = vmatprep.subr.mxu0 %v41
    %1359 = vmatpush1.msra.mxu0 %v40
    %1360 = vmatprep.subr.mxu0 %v38
    %1361 = vmatpush1.msra.mxu0 %v37
    %1362 = vmatprep.subr.mxu0 0.0
    %1363 = vmatpush2.msra.mxu0 0.0
    %1364 = vmatprep.subr.mxu0 0.0
    %1365 = vmatpush2.msra.mxu0 0.0
    %1366 = vmatprep.subr.mxu0 0.0
    %1367 = vmatpush2.msra.mxu0 0.0
    %1368 = vmatprep.subr.mxu0 0.0
    %1369 = vmatpush2.msra.mxu0 0.0
    %1370 = vmatprep.subr.mxu0 0.0
    %1371 = vmatpush2.msra.mxu0 0.0
    %1372 = vmatprep.subr.mxu0 0.0
    %1373 = vmatpush2.msra.mxu0 0.0
    %1374 = vmatprep.subr.mxu0 0.0
    %1375 = vmatpush2.msra.mxu0 0.0
    %1376 = vmatprep.subr.mxu0 0.0
    %1377 = vmatpush2.msra.mxu0 0.0
    %1378 = vmatprep.subr.mxu0 0.0
    %1379 = vmatpush2.msra.mxu0 0.0
    %1380 = vmatprep.subr.mxu0 0.0
    %1381 = vmatpush2.msra.mxu0 0.0
    %1382 = vmatprep.subr.mxu0 0.0
    %1383 = vmatpush2.msra.mxu0 0.0
    %1384 = vmatprep.subr.mxu0 0.0
    %1385 = vmatpush2.msra.mxu0 0.0
    %1386 = vmatprep.subr.mxu0 0.0
    %1387 = vmatpush2.msra.mxu0 0.0
    %1388 = vmatprep.subr.mxu0 0.0
    %1389 = vmatpush2.msra.mxu0 0.0
    %1390 = vmatprep.subr.mxu0 0.0
    %1391 = vmatpush2.msra.mxu0 0.0
    %1392 = vmatprep.subr.mxu0 0.0
    %1393 = vmatpush2.msra.mxu0 0.0
    %1394 = vmatprep.mubr.f32.mxu0 0.0
    %1395 = vmatmul.mubr.f32.gmra.mxu0 %v1328
    %v1396 = vpop.f32.mrf.mxu0
    %v1397 = vadd.f32 0.0, %v1396
    %v1398 = vpop.f32.mrf.mxu0
    %v1399 = vadd.f32 0.0, %v1398
    %1400 = vdwg.mxu0
    %1401 = vmatprep.subr.mxu0 0.0
    %1402 = vmatpush1.msra.mxu0 %v84
    %1403 = vmatprep.subr.mxu0 0.0
    %1404 = vmatpush1.msra.mxu0 %v81
    %1405 = vmatprep.subr.mxu0 0.0
    %1406 = vmatpush1.msra.mxu0 %v78
    %1407 = vmatprep.subr.mxu0 0.0
    %1408 = vmatpush1.msra.mxu0 %v75
    %1409 = vmatprep.subr.mxu0 0.0
    %1410 = vmatpush1.msra.mxu0 %v72
    %1411 = vmatprep.subr.mxu0 0.0
    %1412 = vmatpush1.msra.mxu0 %v69
    %1413 = vmatprep.subr.mxu0 0.0
    %1414 = vmatpush1.msra.mxu0 %v66
    %1415 = vmatprep.subr.mxu0 0.0
    %1416 = vmatpush1.msra.mxu0 %v63
    %1417 = vmatprep.subr.mxu0 0.0
    %1418 = vmatpush1.msra.mxu0 %v60
    %1419 = vmatprep.subr.mxu0 0.0
    %1420 = vmatpush1.msra.mxu0 %v57
    %1421 = vmatprep.subr.mxu0 0.0
    %1422 = vmatpush1.msra.mxu0 %v54
    %1423 = vmatprep.subr.mxu0 0.0
    %1424 = vmatpush1.msra.mxu0 %v51
    %1425 = vmatprep.subr.mxu0 0.0
    %1426 = vmatpush1.msra.mxu0 %v48
    %1427 = vmatprep.subr.mxu0 0.0
    %1428 = vmatpush1.msra.mxu0 %v45
    %1429 = vmatprep.subr.mxu0 0.0
    %1430 = vmatpush1.msra.mxu0 %v42
    %1431 = vmatprep.subr.mxu0 0.0
    %1432 = vmatpush1.msra.mxu0 %v39
    %1433 = vmatprep.subr.mxu0 0.0
    %1434 = vmatpush2.msra.mxu0 0.0
    %1435 = vmatprep.subr.mxu0 0.0
    %1436 = vmatpush2.msra.mxu0 0.0
    %1437 = vmatprep.subr.mxu0 0.0
    %1438 = vmatpush2.msra.mxu0 0.0
    %1439 = vmatprep.subr.mxu0 0.0
    %1440 = vmatpush2.msra.mxu0 0.0
    %1441 = vmatprep.subr.mxu0 0.0
    %1442 = vmatpush2.msra.mxu0 0.0
    %1443 = vmatprep.subr.mxu0 0.0
    %1444 = vmatpush2.msra.mxu0 0.0
    %1445 = vmatprep.subr.mxu0 0.0
    %1446 = vmatpush2.msra.mxu0 0.0
    %1447 = vmatprep.subr.mxu0 0.0
    %1448 = vmatpush2.msra.mxu0 0.0
    %1449 = vmatprep.subr.mxu0 0.0
    %1450 = vmatpush2.msra.mxu0 0.0
    %1451 = vmatprep.subr.mxu0 0.0
    %1452 = vmatpush2.msra.mxu0 0.0
    %1453 = vmatprep.subr.mxu0 0.0
    %1454 = vmatpush2.msra.mxu0 0.0
    %1455 = vmatprep.subr.mxu0 0.0
    %1456 = vmatpush2.msra.mxu0 0.0
    %1457 = vmatprep.subr.mxu0 0.0
    %1458 = vmatpush2.msra.mxu0 0.0
    %1459 = vmatprep.subr.mxu0 0.0
    %1460 = vmatpush2.msra.mxu0 0.0
    %1461 = vmatprep.subr.mxu0 0.0
    %1462 = vmatpush2.msra.mxu0 0.0
    %1463 = vmatprep.subr.mxu0 0.0
    %1464 = vmatpush2.msra.mxu0 0.0
    %1465 = vmatprep.mubr.f32.mxu0 0.0
    %1466 = vmatmul.mubr.f32.gmra.mxu0 %v1328
    %v1467 = vpop.f32.mrf.mxu0
    %v1468 = vadd.f32 0.0, %v1467
    %v1469 = vpop.f32.mrf.mxu0
    %1470 = vdwg.mxu0
    %v1472 = vrot.slane %v1397, 4
    %v1474 = vadd.f32 %v194, %v1472
    %v1475 = vxor.u32 %v1474, 2147483648
    %v1476 = vmul.f32 %v1475, 1.442695
    %v1477 = vpow.pop %v1476
    %v1478 = vadd.f32 %v1477, 1.0
    %v1479 = vrcp.pop %v1478
    %v1480 = vmul.f32 1.0, %v1479
    %v1482 = vrot.slane %v1399, 4
    %v1484 = vadd.f32 %v196, %v1482
    %v1485 = vxor.u32 %v1484, 2147483648
    %v1486 = vmul.f32 %v1485, 1.442695
    %v1487 = vpow.pop %v1486
    %v1488 = vadd.f32 %v1487, 1.0
    %v1489 = vrcp.pop %v1488
    %v1490 = vmul.f32 1.0, %v1489
    %v1491 = vadd.f32 %v1468, %v278
    %v1493 = vrot.slane %v1491, 4
    %v1495 = vmul.f32 %v1480, %v1493
    %v1496 = vadd.f32 %v270, %v1495
    %v1497 = vtanh.pop %v1496
    %v1499 = vrot.slane %v1497, 2
    %v1501 = vsub.f32 %v1326, %v1499
    %v1503 = vrot.slane %v1501, 6
    %v1505 = vmul.f32 %v1490, %v1503
    %v1506 = vadd.f32 %v1497, %v1505
    %v1508 = vrot.slane %v1506, 4
    %1510 = vmatprep.subr.mxu0 %v83
    %1511 = vmatpush1.msra.mxu0 %v82
    %1512 = vmatprep.subr.mxu0 %v80
    %1513 = vmatpush1.msra.mxu0 %v79
    %1514 = vmatprep.subr.mxu0 %v77
    %1515 = vmatpush1.msra.mxu0 %v76
    %1516 = vmatprep.subr.mxu0 %v74
    %1517 = vmatpush1.msra.mxu0 %v73
    %1518 = vmatprep.subr.mxu0 %v71
    %1519 = vmatpush1.msra.mxu0 %v70
    %1520 = vmatprep.subr.mxu0 %v68
    %1521 = vmatpush1.msra.mxu0 %v67
    %1522 = vmatprep.subr.mxu0 %v65
    %1523 = vmatpush1.msra.mxu0 %v64
    %1524 = vmatprep.subr.mxu0 %v62
    %1525 = vmatpush1.msra.mxu0 %v61
    %1526 = vmatprep.subr.mxu0 %v59
    %1527 = vmatpush1.msra.mxu0 %v58
    %1528 = vmatprep.subr.mxu0 %v56
    %1529 = vmatpush1.msra.mxu0 %v55
    %1530 = vmatprep.subr.mxu0 %v53
    %1531 = vmatpush1.msra.mxu0 %v52
    %1532 = vmatprep.subr.mxu0 %v50
    %1533 = vmatpush1.msra.mxu0 %v49
    %1534 = vmatprep.subr.mxu0 %v47
    %1535 = vmatpush1.msra.mxu0 %v46
    %1536 = vmatprep.subr.mxu0 %v44
    %1537 = vmatpush1.msra.mxu0 %v43
    %1538 = vmatprep.subr.mxu0 %v41
    %1539 = vmatpush1.msra.mxu0 %v40
    %1540 = vmatprep.subr.mxu0 %v38
    %1541 = vmatpush1.msra.mxu0 %v37
    %1542 = vmatprep.subr.mxu0 0.0
    %1543 = vmatpush2.msra.mxu0 0.0
    %1544 = vmatprep.subr.mxu0 0.0
    %1545 = vmatpush2.msra.mxu0 0.0
    %1546 = vmatprep.subr.mxu0 0.0
    %1547 = vmatpush2.msra.mxu0 0.0
    %1548 = vmatprep.subr.mxu0 0.0
    %1549 = vmatpush2.msra.mxu0 0.0
    %1550 = vmatprep.subr.mxu0 0.0
    %1551 = vmatpush2.msra.mxu0 0.0
    %1552 = vmatprep.subr.mxu0 0.0
    %1553 = vmatpush2.msra.mxu0 0.0
    %1554 = vmatprep.subr.mxu0 0.0
    %1555 = vmatpush2.msra.mxu0 0.0
    %1556 = vmatprep.subr.mxu0 0.0
    %1557 = vmatpush2.msra.mxu0 0.0
    %1558 = vmatprep.subr.mxu0 0.0
    %1559 = vmatpush2.msra.mxu0 0.0
    %1560 = vmatprep.subr.mxu0 0.0
    %1561 = vmatpush2.msra.mxu0 0.0
    %1562 = vmatprep.subr.mxu0 0.0
    %1563 = vmatpush2.msra.mxu0 0.0
    %1564 = vmatprep.subr.mxu0 0.0
    %1565 = vmatpush2.msra.mxu0 0.0
    %1566 = vmatprep.subr.mxu0 0.0
    %1567 = vmatpush2.msra.mxu0 0.0
    %1568 = vmatprep.subr.mxu0 0.0
    %1569 = vmatpush2.msra.mxu0 0.0
    %1570 = vmatprep.subr.mxu0 0.0
    %1571 = vmatpush2.msra.mxu0 0.0
    %1572 = vmatprep.subr.mxu0 0.0
    %1573 = vmatpush2.msra.mxu0 0.0
    %1574 = vmatprep.mubr.f32.mxu0 0.0
    %1575 = vmatmul.mubr.f32.gmra.mxu0 %v1508
    %v1576 = vpop.f32.mrf.mxu0
    %v1577 = vadd.f32 0.0, %v1576
    %v1578 = vpop.f32.mrf.mxu0
    %v1579 = vadd.f32 0.0, %v1578
    %1580 = vdwg.mxu0
    %1581 = vmatprep.subr.mxu0 0.0
    %1582 = vmatpush1.msra.mxu0 %v84
    %1583 = vmatprep.subr.mxu0 0.0
    %1584 = vmatpush1.msra.mxu0 %v81
    %1585 = vmatprep.subr.mxu0 0.0
    %1586 = vmatpush1.msra.mxu0 %v78
    %1587 = vmatprep.subr.mxu0 0.0
    %1588 = vmatpush1.msra.mxu0 %v75
    %1589 = vmatprep.subr.mxu0 0.0
    %1590 = vmatpush1.msra.mxu0 %v72
    %1591 = vmatprep.subr.mxu0 0.0
    %1592 = vmatpush1.msra.mxu0 %v69
    %1593 = vmatprep.subr.mxu0 0.0
    %1594 = vmatpush1.msra.mxu0 %v66
    %1595 = vmatprep.subr.mxu0 0.0
    %1596 = vmatpush1.msra.mxu0 %v63
    %1597 = vmatprep.subr.mxu0 0.0
    %1598 = vmatpush1.msra.mxu0 %v60
    %1599 = vmatprep.subr.mxu0 0.0
    %1600 = vmatpush1.msra.mxu0 %v57
    %1601 = vmatprep.subr.mxu0 0.0
    %1602 = vmatpush1.msra.mxu0 %v54
    %1603 = vmatprep.subr.mxu0 0.0
    %1604 = vmatpush1.msra.mxu0 %v51
    %1605 = vmatprep.subr.mxu0 0.0
    %1606 = vmatpush1.msra.mxu0 %v48
    %1607 = vmatprep.subr.mxu0 0.0
    %1608 = vmatpush1.msra.mxu0 %v45
    %1609 = vmatprep.subr.mxu0 0.0
    %1610 = vmatpush1.msra.mxu0 %v42
    %1611 = vmatprep.subr.mxu0 0.0
    %1612 = vmatpush1.msra.mxu0 %v39
    %1613 = vmatprep.subr.mxu0 0.0
    %1614 = vmatpush2.msra.mxu0 0.0
    %1615 = vmatprep.subr.mxu0 0.0
    %1616 = vmatpush2.msra.mxu0 0.0
    %1617 = vmatprep.subr.mxu0 0.0
    %1618 = vmatpush2.msra.mxu0 0.0
    %1619 = vmatprep.subr.mxu0 0.0
    %1620 = vmatpush2.msra.mxu0 0.0
    %1621 = vmatprep.subr.mxu0 0.0
    %1622 = vmatpush2.msra.mxu0 0.0
    %1623 = vmatprep.subr.mxu0 0.0
    %1624 = vmatpush2.msra.mxu0 0.0
    %1625 = vmatprep.subr.mxu0 0.0
    %1626 = vmatpush2.msra.mxu0 0.0
    %1627 = vmatprep.subr.mxu0 0.0
    %1628 = vmatpush2.msra.mxu0 0.0
    %1629 = vmatprep.subr.mxu0 0.0
    %1630 = vmatpush2.msra.mxu0 0.0
    %1631 = vmatprep.subr.mxu0 0.0
    %1632 = vmatpush2.msra.mxu0 0.0
    %1633 = vmatprep.subr.mxu0 0.0
    %1634 = vmatpush2.msra.mxu0 0.0
    %1635 = vmatprep.subr.mxu0 0.0
    %1636 = vmatpush2.msra.mxu0 0.0
    %1637 = vmatprep.subr.mxu0 0.0
    %1638 = vmatpush2.msra.mxu0 0.0
    %1639 = vmatprep.subr.mxu0 0.0
    %1640 = vmatpush2.msra.mxu0 0.0
    %1641 = vmatprep.subr.mxu0 0.0
    %1642 = vmatpush2.msra.mxu0 0.0
    %1643 = vmatprep.subr.mxu0 0.0
    %1644 = vmatpush2.msra.mxu0 0.0
    %1645 = vmatprep.mubr.f32.mxu0 0.0
    %1646 = vmatmul.mubr.f32.gmra.mxu0 %v1508
    %v1647 = vpop.f32.mrf.mxu0
    %v1648 = vadd.f32 0.0, %v1647
    %v1649 = vpop.f32.mrf.mxu0
    %1650 = vdwg.mxu0
    %v1652 = vrot.slane %v1577, 2
    %v1654 = vadd.f32 %v194, %v1652
    %v1655 = vxor.u32 %v1654, 2147483648
    %v1656 = vmul.f32 %v1655, 1.442695
    %v1657 = vpow.pop %v1656
    %v1658 = vadd.f32 %v1657, 1.0
    %v1659 = vrcp.pop %v1658
    %v1660 = vmul.f32 1.0, %v1659
    %v1662 = vrot.slane %v1579, 2
    %v1664 = vadd.f32 %v196, %v1662
    %v1665 = vxor.u32 %v1664, 2147483648
    %v1666 = vmul.f32 %v1665, 1.442695
    %v1667 = vpow.pop %v1666
    %v1668 = vadd.f32 %v1667, 1.0
    %v1669 = vrcp.pop %v1668
    %v1670 = vmul.f32 1.0, %v1669
    %v1671 = vadd.f32 %v1648, %v278
    %v1673 = vrot.slane %v1671, 2
    %v1675 = vmul.f32 %v1660, %v1673
    %v1676 = vadd.f32 %v270, %v1675
    %v1677 = vtanh.pop %v1676
    %v1679 = vrot.slane %v1677, 2
    %v1681 = vsub.f32 %v1506, %v1679
    %v1683 = vrot.slane %v1681, 6
    %v1685 = vmul.f32 %v1670, %v1683
    %v1686 = vadd.f32 %v1677, %v1685
    %vm1687 = vcmask 261126
    %1688 = vst.msk [vmem:[#allocation5 - $0x6] sm:$0xc0] %vm1687, %v1686
    // Predicated region
    $region26: #{tpu_custom_call.1} parent=1 // pred_check
      _
    $region27: #{tpu_custom_call.1} parent=1 // pred_check_branch
      %1690 = sbr.rel (0) target = $region29
    $region28: #{tpu_custom_call.1} parent=1 // pred_region
      %s1692 = ssub.s32 32, 32
      %1693 = vsyncadd [#allocation4], %s1692
      %s1695 = sshll.u32 [#allocation5], 4
      %s1696 = int_to_ptr.vmem [resolvable:$true] %s1695
      %1698 = dma.vmem_to_hbm [thread:$0]  %s1696, 32, %s5, [#allocation4]
    $region29: #{tpu_custom_call.1} parent=1 // pred_fallthru
      _
    // Predicated region
    $region30: #{tpu_custom_call.1} parent=1 // pred_check
      _
    $region31: #{tpu_custom_call.1} parent=1 // pred_check_branch
      %1700 = sbr.rel (0) target = $region33
    $region32: #{tpu_custom_call.1} parent=1 // pred_region
      %1701 = dma.done [#allocation4], 32
    $region33: #{tpu_custom_call.1} parent=1 // pred_fallthru
      _
    %1702 = vsyncpa [#allocation3], 1
    %1703 = vsyncpa [#allocation4], 1

</llo_original>
